<compile_context>
chip_gen: v7x
topology: tpu7x:2x2x1
jax: 0.10.0
libtpu: 0.0.40
codegen_flags: <defaults>
</compile_context>

<pallas_src>
import math
from functools import partial

import jax
import jax.numpy as jnp
from jax.experimental import pallas as pl
from jax.experimental.pallas import tpu as pltpu


def decoder_kernel(x_ref, h_ref, lk_ref, wx0_ref, wh_ref, bh_ref, pw_ref, pb_ref,
                   out_ref, h_out_ref, *, compute_dtype):
    f32 = jnp.float32
    Lk = lk_ref[...].astype(compute_dtype)      # (M, M) block-diagonal diffusion

    def mm(a, b):
        return jnp.dot(a.astype(compute_dtype), b.astype(compute_dtype),
                       preferred_element_type=f32)

    def bias(i):                                # (1, H) f32, broadcasts over rows
        return bh_ref[i:i + 1]

    x = x_ref[...]                              # (M, Din) f32
    h0 = h_ref[0]                               # (M, H)   f32
    h1 = h_ref[1]                               # (M, H)   f32

    # ----- STGRU cell 0: input = x, state = h0 ------------------------------
    lx = mm(Lk, x)                              # Lk @ x, shared by gcn_1 and gcn_2
    ls = mm(Lk, h0)
    r = jax.nn.sigmoid(jax.nn.relu(mm(lx, wx0_ref[0]) + mm(ls, wh_ref[0])) + bias(0))
    u = jax.nn.sigmoid(jax.nn.relu(mm(lx, wx0_ref[1]) + mm(ls, wh_ref[1])) + bias(1))
    lrs = mm(Lk, r * h0)
    c = jnp.tanh(jax.nn.relu(mm(lx, wx0_ref[2]) + mm(lrs, wh_ref[2])) + bias(2))
    new_h0 = u * h0 + (1.0 - u) * c             # f32 gate math

    # ----- STGRU cell 1: input = new_h0, state = h1 --------------------------
    lx = mm(Lk, new_h0)
    ls = mm(Lk, h1)
    r = jax.nn.sigmoid(jax.nn.relu(mm(lx, wh_ref[3]) + mm(ls, wh_ref[6])) + bias(3))
    u = jax.nn.sigmoid(jax.nn.relu(mm(lx, wh_ref[4]) + mm(ls, wh_ref[7])) + bias(4))
    lrs = mm(Lk, r * h1)
    c = jnp.tanh(jax.nn.relu(mm(lx, wh_ref[5]) + mm(lrs, wh_ref[8])) + bias(5))
    new_h1 = u * h1 + (1.0 - u) * c

    # ----- projection: new_h1 @ W + b  (W pre-transposed to (H, Dout)) -------
    out_ref[...] = mm(new_h1, pw_ref[...]) + pb_ref[...]
    h_out_ref[0] = new_h0
    h_out_ref[1] = new_h1


def _default_grid_blocks(batch):
    """2-way batch split on v7x (2 TensorCores/chip); single grid step elsewhere."""
    try:
        kind = jax.devices()[0].device_kind.lower()
    except Exception:
        return 1
    if ("v7" in kind or "tpu7" in kind) and batch % 2 == 0:
        return 2
    return 1


def decoder_forward(inputs, hidden_state, adj, params,
                    use_bf16=True, num_grid_blocks=None):
    """inputs: (B, N, Din); hidden_state: (2, B, N, H); adj: (N, N)."""
    B, N, Din = inputs.shape
    H = hidden_state.shape[-1]
    Dout = params["proj_w"].shape[1]
    M = B * N

    G = num_grid_blocks if num_grid_blocks is not None else _default_grid_blocks(B)
    if B % G != 0 or ((B // G) * N) % 8 != 0:
        G = 1                                   # fall back to one fused grid step
    Bb, Mb = B // G, M // G

    f32 = jnp.float32
    wdt = jnp.bfloat16 if use_bf16 else f32     # matmul operand dtype

    # ---- host-side operand prep (layout plumbing, not compute) --------------
    x2 = inputs.reshape(M, Din).astype(f32)
    h2 = hidden_state.reshape(2, M, H).astype(f32)

    # block-diagonal diffusion matrix: one Lk block per batch element in a step
    lk_blk = jnp.kron(jnp.eye(Bb, dtype=adj.dtype), adj).astype(wdt)     # (Mb, Mb)

    th01, th02 = params["th_l0g1"], params["th_l0g2"]    # (Din+H, 2H), (Din+H, H)
    th11, th12 = params["th_l1g1"], params["th_l1g2"]    # (2H, 2H),    (2H, H)

    # layer-0 input-side thetas (rows 0:Din), split column-wise into r / u / c
    wx0 = jnp.stack([th01[:Din, :H], th01[:Din, H:], th02[:Din, :]]).astype(wdt)  # (3, Din, H)
    # all H-row thetas: layer-0 state side, layer-1 input side, layer-1 state side
    wh = jnp.stack([
        th01[Din:, :H], th01[Din:, H:], th02[Din:, :],   # 0..2: l0 state  (r, u, c)
        th11[:H, :H],   th11[:H, H:],   th12[:H, :],     # 3..5: l1 input  (r, u, c)
        th11[H:, :H],   th11[H:, H:],   th12[H:, :],     # 6..8: l1 state  (r, u, c)
    ]).astype(wdt)                                       # (9, H, H)

    b01 = params["b_l0g1"].reshape(-1)
    b02 = params["b_l0g2"].reshape(-1)
    b11 = params["b_l1g1"].reshape(-1)
    b12 = params["b_l1g2"].reshape(-1)
    bh = jnp.stack([b01[:H], b01[H:], b02, b11[:H], b11[H:], b12]).astype(f32)  # (6, H)

    pw = params["proj_w"].astype(wdt)                    # (H, Dout)
    pb = params["proj_b"].reshape(1, Dout).astype(f32)   # (1, Dout)

    full = lambda shape: pl.BlockSpec(shape, lambda g, _s=shape: (0,) * len(_s))

    # NOTE: output last dims (Dout=4, H=32) stay < 128 lanes; packing them into a
    # 128-wide slab would need an in-kernel lane concat (XLU relayout) that costs
    # more than the handful of masked stores at these shapes.
    out, h_new = pl.pallas_call(
        partial(decoder_kernel, compute_dtype=wdt),
        out_shape=(
            jax.ShapeDtypeStruct((M, Dout), f32),
            jax.ShapeDtypeStruct((2, M, H), f32),
        ),
        grid=(G,),
        in_specs=[
            pl.BlockSpec((Mb, Din), lambda g: (g, 0)),        # x
            pl.BlockSpec((2, Mb, H), lambda g: (0, g, 0)),    # hidden (both layers)
            full(lk_blk.shape),                               # block-diag Lk
            full(wx0.shape), full(wh.shape), full(bh.shape),  # packed weights/biases
            full(pw.shape), full(pb.shape),                   # projection
        ],
        out_specs=(
            pl.BlockSpec((Mb, Dout), lambda g: (g, 0)),
            pl.BlockSpec((2, Mb, H), lambda g: (0, g, 0)),
        ),
        input_output_aliases={1: 1},   # hidden state in -> hidden state out
        compiler_params=pltpu.CompilerParams(dimension_semantics=("parallel",)),
    )(x2, h2, lk_blk, wx0, wh, bh, pw, pb)

    return out.reshape(B, N, Dout), h_new.reshape(2, B, N, H)


# ---------------- deterministic parameter init (synthetic) ----------------
def _uniform(key, shape, bound):
    return jax.random.uniform(key, shape, jnp.float32, minval=-bound, maxval=bound)


def init_params(key, out_dim, rnn_unit):
    H = rnn_unit
    ks = jax.random.split(key, 10)

    def gcn_params(k1, k2, c_in, c_out):
        bound = 1.0 / math.sqrt(c_out)  # ~ kaiming_uniform(a=sqrt(5)) bound for (c_in,c_out)
        return _uniform(k1, (c_in, c_out), bound), _uniform(k2, (1, 1, c_out), bound)

    th_l0g1, b_l0g1 = gcn_params(ks[0], ks[1], out_dim + H, 2 * H)
    th_l0g2, b_l0g2 = gcn_params(ks[2], ks[3], out_dim + H, H)
    th_l1g1, b_l1g1 = gcn_params(ks[4], ks[5], 2 * H, 2 * H)
    th_l1g2, b_l1g2 = gcn_params(ks[6], ks[7], 2 * H, H)
    pbound = 1.0 / math.sqrt(H)
    proj_w = _uniform(ks[8], (H, out_dim), pbound)   # nn.Linear weight, pre-transposed
    proj_b = _uniform(ks[9], (1, out_dim), pbound)
    return dict(th_l0g1=th_l0g1, b_l0g1=b_l0g1, th_l0g2=th_l0g2, b_l0g2=b_l0g2,
                th_l1g1=th_l1g1, b_l1g1=b_l1g1, th_l1g2=th_l1g2, b_l1g2=b_l1g2,
                proj_w=proj_w, proj_b=proj_b)


# ---------------- pure-JAX reference (matches PyTorch semantics) ----------------
def _gcn_ref(Lk, inp, state, theta, b):
    ins = jnp.concatenate([inp, state], axis=2)                         # (B, N, Cin)
    lfs = jnp.einsum('ij,jkl->kil', Lk, jnp.transpose(ins, (1, 0, 2)))  # (B, N, Cin)
    return jax.nn.relu(jnp.matmul(lfs, theta)) + b


def _stgru_ref(Lk, inp, state, th1, b1, th2, b2, c_out):
    value = jax.nn.sigmoid(_gcn_ref(Lk, inp, state, th1, b1))
    r, u = value[..., :c_out], value[..., c_out:]
    c = jnp.tanh(_gcn_ref(Lk, inp, r * state, th2, b2))
    return u * state + (1.0 - u) * c


def decoder_ref(inputs, hidden, adj, params):
    H = hidden.shape[-1]
    h0 = _stgru_ref(adj, inputs, hidden[0],
                    params["th_l0g1"], params["b_l0g1"],
                    params["th_l0g2"], params["b_l0g2"], H)
    h1 = _stgru_ref(adj, h0, hidden[1],
                    params["th_l1g1"], params["b_l1g1"],
                    params["th_l1g2"], params["b_l1g2"], H)
    out = jnp.matmul(h1, params["proj_w"]) + params["proj_b"][0]
    return out, jnp.stack([h0, h1], axis=0)


if __name__ == "__main__":
    B, N, H, Dout = 2, 16, 32, 4   # batch, num_node, rnn_unit, output_dim (= decoder input_dim)

    key = jax.random.PRNGKey(0)
    k_inp, k_hid, k_adj, k_par = jax.random.split(key, 4)

    inputs = jax.random.normal(k_inp, (B, N, Dout), jnp.float32)
    hidden = jax.random.normal(k_hid, (2, B, N, H), jnp.float32)
    adj = jax.random.uniform(k_adj, (N, N), jnp.float32)
    adj = adj / jnp.sum(adj, axis=1, keepdims=True)     # row-normalized diffusion matrix
    params = init_params(k_par, Dout, H)

    out_r, hid_r = decoder_ref(inputs, hidden, adj, params)

    fwd = jax.jit(decoder_forward, static_argnames=("use_bf16", "num_grid_blocks"))

    # exact path (f32 matmul operands) — must match the reference tightly
    out32, hid32 = fwd(inputs, hidden, adj, params, use_bf16=False)
    jax.block_until_ready((out32, hid32))
    assert out32.shape == (B, N, Dout) and hid32.shape == (2, B, N, H)
    assert jnp.allclose(out32, out_r, rtol=1e-4, atol=1e-4)
    assert jnp.allclose(hid32, hid_r, rtol=1e-4, atol=1e-4)

    # performance path (bf16 matmul operands, f32 accumulate + f32 gate math)
    out_bf, hid_bf = fwd(inputs, hidden, adj, params, use_bf16=True)
    jax.block_until_ready((out_bf, hid_bf))
    assert jnp.allclose(out_bf, out_r, rtol=5e-2, atol=5e-2)
    assert jnp.allclose(hid_bf, hid_r, rtol=5e-2, atol=5e-2)

    print("KERNEL_OK")
</pallas_src>

<mosaic_0001>
module attributes {stable_mosaic.version = 11 : i64} {
  func.func @decoder_kernel(%arg0: i32, %arg1: memref<32x4xf32, #tpu.memory_space<vmem>>, %arg2: memref<2x32x32xf32, #tpu.memory_space<vmem>>, %arg3: memref<32x32xf32, #tpu.memory_space<vmem>>, %arg4: memref<3x4x32xf32, #tpu.memory_space<vmem>>, %arg5: memref<9x32x32xf32, #tpu.memory_space<vmem>>, %arg6: memref<6x32xf32, #tpu.memory_space<vmem>>, %arg7: memref<32x4xf32, #tpu.memory_space<vmem>>, %arg8: memref<1x4xf32, #tpu.memory_space<vmem>>, %arg9: memref<32x4xf32, #tpu.memory_space<vmem>>, %arg10: memref<2x32x32xf32, #tpu.memory_space<vmem>>) attributes {dimension_semantics = [#tpu.dimension_semantics<parallel>], iteration_bounds = array<i64: 1>, scalar_prefetch = 0 : i64, scratch_operands = 0 : i64, tpu.core_type = #tpu.core_type<tc>, window_params = [{transform_indices = @transform_0, window_bounds = array<i64: 32, 4>}, {transform_indices = @transform_1, window_bounds = array<i64: 2, 32, 32>}, {pipeline_mode = #tpu.pipeline_mode<synchronous>, transform_indices = @transform_2, window_bounds = array<i64: 32, 32>}, {pipeline_mode = #tpu.pipeline_mode<synchronous>, transform_indices = @transform_3, window_bounds = array<i64: 3, 4, 32>}, {pipeline_mode = #tpu.pipeline_mode<synchronous>, transform_indices = @transform_4, window_bounds = array<i64: 9, 32, 32>}, {pipeline_mode = #tpu.pipeline_mode<synchronous>, transform_indices = @transform_5, window_bounds = array<i64: 6, 32>}, {pipeline_mode = #tpu.pipeline_mode<synchronous>, transform_indices = @transform_6, window_bounds = array<i64: 32, 4>}, {pipeline_mode = #tpu.pipeline_mode<synchronous>, transform_indices = @transform_7, window_bounds = array<i64: 1, 4>}, {transform_indices = @transform_8, window_bounds = array<i64: 32, 4>}, {transform_indices = @transform_9, window_bounds = array<i64: 2, 32, 32>}]} {
    %c0 = arith.constant 0 : index
    %c0_0 = arith.constant 0 : index
    %0 = vector.load %arg3[%c0, %c0_0] : memref<32x32xf32, #tpu.memory_space<vmem>>, vector<32x32xf32>
    %c0_1 = arith.constant 0 : index
    %c0_2 = arith.constant 0 : index
    %1 = vector.load %arg1[%c0_1, %c0_2] : memref<32x4xf32, #tpu.memory_space<vmem>>, vector<32x4xf32>
    %c0_3 = arith.constant 0 : index
    %c0_4 = arith.constant 0 : index
    %c0_5 = arith.constant 0 : index
    %2 = vector.load %arg2[%c0_3, %c0_4, %c0_5] : memref<2x32x32xf32, #tpu.memory_space<vmem>>, vector<1x32x32xf32>
    %3 = vector.shape_cast %2 : vector<1x32x32xf32> to vector<32x32xf32>
    %c1 = arith.constant 1 : index
    %c0_6 = arith.constant 0 : index
    %c0_7 = arith.constant 0 : index
    %4 = vector.load %arg2[%c1, %c0_6, %c0_7] : memref<2x32x32xf32, #tpu.memory_space<vmem>>, vector<1x32x32xf32>
    %5 = vector.shape_cast %4 : vector<1x32x32xf32> to vector<32x32xf32>
    %cst = arith.constant dense<0.000000e+00> : vector<32x4xf32>
    %6 = tpu.matmul %0, %1, %cst {dimension_numbers = #tpu.dot_dimension_numbers<[1], [0], [0], [1], [0, 0, 1, 1], [], []>} : vector<32x32xf32>, vector<32x4xf32>, vector<32x4xf32> -> vector<32x4xf32>
    %cst_8 = arith.constant dense<0.000000e+00> : vector<32x32xf32>
    %7 = tpu.matmul %0, %3, %cst_8 {dimension_numbers = #tpu.dot_dimension_numbers<[1], [0], [0], [1], [0, 0, 1, 1], [], []>} : vector<32x32xf32>, vector<32x32xf32>, vector<32x32xf32> -> vector<32x32xf32>
    %c0_9 = arith.constant 0 : index
    %c0_10 = arith.constant 0 : index
    %c0_11 = arith.constant 0 : index
    %8 = vector.load %arg4[%c0_9, %c0_10, %c0_11] : memref<3x4x32xf32, #tpu.memory_space<vmem>>, vector<1x4x32xf32>
    %9 = vector.shape_cast %8 : vector<1x4x32xf32> to vector<4x32xf32>
    %cst_12 = arith.constant dense<0.000000e+00> : vector<32x32xf32>
    %10 = tpu.matmul %6, %9, %cst_12 {dimension_numbers = #tpu.dot_dimension_numbers<[1], [0], [0], [1], [0, 0, 1, 1], [], []>} : vector<32x4xf32>, vector<4x32xf32>, vector<32x32xf32> -> vector<32x32xf32>
    %c0_13 = arith.constant 0 : index
    %c0_14 = arith.constant 0 : index
    %c0_15 = arith.constant 0 : index
    %11 = vector.load %arg5[%c0_13, %c0_14, %c0_15] : memref<9x32x32xf32, #tpu.memory_space<vmem>>, vector<1x32x32xf32>
    %12 = vector.shape_cast %11 : vector<1x32x32xf32> to vector<32x32xf32>
    %cst_16 = arith.constant dense<0.000000e+00> : vector<32x32xf32>
    %13 = tpu.matmul %7, %12, %cst_16 {dimension_numbers = #tpu.dot_dimension_numbers<[1], [0], [0], [1], [0, 0, 1, 1], [], []>} : vector<32x32xf32>, vector<32x32xf32>, vector<32x32xf32> -> vector<32x32xf32>
    %14 = arith.addf %10, %13 : vector<32x32xf32>
    %cst_17 = arith.constant 0.000000e+00 : f32
    %15 = vector.broadcast %cst_17 : f32 to vector<32x32xf32>
    %16 = arith.maximumf %14, %15 : vector<32x32xf32>
    %c0_18 = arith.constant 0 : index
    %c0_19 = arith.constant 0 : index
    %17 = vector.load %arg6[%c0_18, %c0_19] : memref<6x32xf32, #tpu.memory_space<vmem>>, vector<1x32xf32>
    %18 = vector.broadcast %17 : vector<1x32xf32> to vector<32x32xf32>
    %19 = arith.addf %16, %18 : vector<32x32xf32>
    %20 = arith.negf %19 : vector<32x32xf32>
    %21 = math.exp %20 : vector<32x32xf32>
    %cst_20 = arith.constant 1.000000e+00 : f32
    %22 = vector.broadcast %cst_20 : f32 to vector<32x32xf32>
    %23 = arith.addf %22, %21 : vector<32x32xf32>
    %24 = arith.divf %22, %23 : vector<32x32xf32>
    %c1_21 = arith.constant 1 : index
    %c0_22 = arith.constant 0 : index
    %c0_23 = arith.constant 0 : index
    %25 = vector.load %arg4[%c1_21, %c0_22, %c0_23] : memref<3x4x32xf32, #tpu.memory_space<vmem>>, vector<1x4x32xf32>
    %26 = vector.shape_cast %25 : vector<1x4x32xf32> to vector<4x32xf32>
    %cst_24 = arith.constant dense<0.000000e+00> : vector<32x32xf32>
    %27 = tpu.matmul %6, %26, %cst_24 {dimension_numbers = #tpu.dot_dimension_numbers<[1], [0], [0], [1], [0, 0, 1, 1], [], []>} : vector<32x4xf32>, vector<4x32xf32>, vector<32x32xf32> -> vector<32x32xf32>
    %c1_25 = arith.constant 1 : index
    %c0_26 = arith.constant 0 : index
    %c0_27 = arith.constant 0 : index
    %28 = vector.load %arg5[%c1_25, %c0_26, %c0_27] : memref<9x32x32xf32, #tpu.memory_space<vmem>>, vector<1x32x32xf32>
    %29 = vector.shape_cast %28 : vector<1x32x32xf32> to vector<32x32xf32>
    %cst_28 = arith.constant dense<0.000000e+00> : vector<32x32xf32>
    %30 = tpu.matmul %7, %29, %cst_28 {dimension_numbers = #tpu.dot_dimension_numbers<[1], [0], [0], [1], [0, 0, 1, 1], [], []>} : vector<32x32xf32>, vector<32x32xf32>, vector<32x32xf32> -> vector<32x32xf32>
    %31 = arith.addf %27, %30 : vector<32x32xf32>
    %cst_29 = arith.constant 0.000000e+00 : f32
    %32 = vector.broadcast %cst_29 : f32 to vector<32x32xf32>
    %33 = arith.maximumf %31, %32 : vector<32x32xf32>
    %c1_30 = arith.constant 1 : index
    %c0_31 = arith.constant 0 : index
    %34 = vector.load %arg6[%c1_30, %c0_31] : memref<6x32xf32, #tpu.memory_space<vmem>>, vector<1x32xf32>
    %35 = vector.broadcast %34 : vector<1x32xf32> to vector<32x32xf32>
    %36 = arith.addf %33, %35 : vector<32x32xf32>
    %37 = arith.negf %36 : vector<32x32xf32>
    %38 = math.exp %37 : vector<32x32xf32>
    %cst_32 = arith.constant 1.000000e+00 : f32
    %39 = vector.broadcast %cst_32 : f32 to vector<32x32xf32>
    %40 = arith.addf %39, %38 : vector<32x32xf32>
    %41 = arith.divf %39, %40 : vector<32x32xf32>
    %42 = arith.mulf %24, %3 : vector<32x32xf32>
    %cst_33 = arith.constant dense<0.000000e+00> : vector<32x32xf32>
    %43 = tpu.matmul %0, %42, %cst_33 {dimension_numbers = #tpu.dot_dimension_numbers<[1], [0], [0], [1], [0, 0, 1, 1], [], []>} : vector<32x32xf32>, vector<32x32xf32>, vector<32x32xf32> -> vector<32x32xf32>
    %c2 = arith.constant 2 : index
    %c0_34 = arith.constant 0 : index
    %c0_35 = arith.constant 0 : index
    %44 = vector.load %arg4[%c2, %c0_34, %c0_35] : memref<3x4x32xf32, #tpu.memory_space<vmem>>, vector<1x4x32xf32>
    %45 = vector.shape_cast %44 : vector<1x4x32xf32> to vector<4x32xf32>
    %cst_36 = arith.constant dense<0.000000e+00> : vector<32x32xf32>
    %46 = tpu.matmul %6, %45, %cst_36 {dimension_numbers = #tpu.dot_dimension_numbers<[1], [0], [0], [1], [0, 0, 1, 1], [], []>} : vector<32x4xf32>, vector<4x32xf32>, vector<32x32xf32> -> vector<32x32xf32>
    %c2_37 = arith.constant 2 : index
    %c0_38 = arith.constant 0 : index
    %c0_39 = arith.constant 0 : index
    %47 = vector.load %arg5[%c2_37, %c0_38, %c0_39] : memref<9x32x32xf32, #tpu.memory_space<vmem>>, vector<1x32x32xf32>
    %48 = vector.shape_cast %47 : vector<1x32x32xf32> to vector<32x32xf32>
    %cst_40 = arith.constant dense<0.000000e+00> : vector<32x32xf32>
    %49 = tpu.matmul %43, %48, %cst_40 {dimension_numbers = #tpu.dot_dimension_numbers<[1], [0], [0], [1], [0, 0, 1, 1], [], []>} : vector<32x32xf32>, vector<32x32xf32>, vector<32x32xf32> -> vector<32x32xf32>
    %50 = arith.addf %46, %49 : vector<32x32xf32>
    %cst_41 = arith.constant 0.000000e+00 : f32
    %51 = vector.broadcast %cst_41 : f32 to vector<32x32xf32>
    %52 = arith.maximumf %50, %51 : vector<32x32xf32>
    %c2_42 = arith.constant 2 : index
    %c0_43 = arith.constant 0 : index
    %53 = vector.load %arg6[%c2_42, %c0_43] : memref<6x32xf32, #tpu.memory_space<vmem>>, vector<1x32xf32>
    %54 = vector.broadcast %53 : vector<1x32xf32> to vector<32x32xf32>
    %55 = arith.addf %52, %54 : vector<32x32xf32>
    %56 = math.tanh %55 : vector<32x32xf32>
    %57 = arith.mulf %41, %3 : vector<32x32xf32>
    %cst_44 = arith.constant 1.000000e+00 : f32
    %58 = vector.broadcast %cst_44 : f32 to vector<32x32xf32>
    %59 = arith.subf %58, %41 : vector<32x32xf32>
    %60 = arith.mulf %59, %56 : vector<32x32xf32>
    %61 = arith.addf %57, %60 : vector<32x32xf32>
    %cst_45 = arith.constant dense<0.000000e+00> : vector<32x32xf32>
    %62 = tpu.matmul %0, %61, %cst_45 {dimension_numbers = #tpu.dot_dimension_numbers<[1], [0], [0], [1], [0, 0, 1, 1], [], []>} : vector<32x32xf32>, vector<32x32xf32>, vector<32x32xf32> -> vector<32x32xf32>
    %cst_46 = arith.constant dense<0.000000e+00> : vector<32x32xf32>
    %63 = tpu.matmul %0, %5, %cst_46 {dimension_numbers = #tpu.dot_dimension_numbers<[1], [0], [0], [1], [0, 0, 1, 1], [], []>} : vector<32x32xf32>, vector<32x32xf32>, vector<32x32xf32> -> vector<32x32xf32>
    %c3 = arith.constant 3 : index
    %c0_47 = arith.constant 0 : index
    %c0_48 = arith.constant 0 : index
    %64 = vector.load %arg5[%c3, %c0_47, %c0_48] : memref<9x32x32xf32, #tpu.memory_space<vmem>>, vector<1x32x32xf32>
    %65 = vector.shape_cast %64 : vector<1x32x32xf32> to vector<32x32xf32>
    %cst_49 = arith.constant dense<0.000000e+00> : vector<32x32xf32>
    %66 = tpu.matmul %62, %65, %cst_49 {dimension_numbers = #tpu.dot_dimension_numbers<[1], [0], [0], [1], [0, 0, 1, 1], [], []>} : vector<32x32xf32>, vector<32x32xf32>, vector<32x32xf32> -> vector<32x32xf32>
    %c6 = arith.constant 6 : index
    %c0_50 = arith.constant 0 : index
    %c0_51 = arith.constant 0 : index
    %67 = vector.load %arg5[%c6, %c0_50, %c0_51] : memref<9x32x32xf32, #tpu.memory_space<vmem>>, vector<1x32x32xf32>
    %68 = vector.shape_cast %67 : vector<1x32x32xf32> to vector<32x32xf32>
    %cst_52 = arith.constant dense<0.000000e+00> : vector<32x32xf32>
    %69 = tpu.matmul %63, %68, %cst_52 {dimension_numbers = #tpu.dot_dimension_numbers<[1], [0], [0], [1], [0, 0, 1, 1], [], []>} : vector<32x32xf32>, vector<32x32xf32>, vector<32x32xf32> -> vector<32x32xf32>
    %70 = arith.addf %66, %69 : vector<32x32xf32>
    %cst_53 = arith.constant 0.000000e+00 : f32
    %71 = vector.broadcast %cst_53 : f32 to vector<32x32xf32>
    %72 = arith.maximumf %70, %71 : vector<32x32xf32>
    %c3_54 = arith.constant 3 : index
    %c0_55 = arith.constant 0 : index
    %73 = vector.load %arg6[%c3_54, %c0_55] : memref<6x32xf32, #tpu.memory_space<vmem>>, vector<1x32xf32>
    %74 = vector.broadcast %73 : vector<1x32xf32> to vector<32x32xf32>
    %75 = arith.addf %72, %74 : vector<32x32xf32>
    %76 = arith.negf %75 : vector<32x32xf32>
    %77 = math.exp %76 : vector<32x32xf32>
    %cst_56 = arith.constant 1.000000e+00 : f32
    %78 = vector.broadcast %cst_56 : f32 to vector<32x32xf32>
    %79 = arith.addf %78, %77 : vector<32x32xf32>
    %80 = arith.divf %78, %79 : vector<32x32xf32>
    %c4 = arith.constant 4 : index
    %c0_57 = arith.constant 0 : index
    %c0_58 = arith.constant 0 : index
    %81 = vector.load %arg5[%c4, %c0_57, %c0_58] : memref<9x32x32xf32, #tpu.memory_space<vmem>>, vector<1x32x32xf32>
    %82 = vector.shape_cast %81 : vector<1x32x32xf32> to vector<32x32xf32>
    %cst_59 = arith.constant dense<0.000000e+00> : vector<32x32xf32>
    %83 = tpu.matmul %62, %82, %cst_59 {dimension_numbers = #tpu.dot_dimension_numbers<[1], [0], [0], [1], [0, 0, 1, 1], [], []>} : vector<32x32xf32>, vector<32x32xf32>, vector<32x32xf32> -> vector<32x32xf32>
    %c7 = arith.constant 7 : index
    %c0_60 = arith.constant 0 : index
    %c0_61 = arith.constant 0 : index
    %84 = vector.load %arg5[%c7, %c0_60, %c0_61] : memref<9x32x32xf32, #tpu.memory_space<vmem>>, vector<1x32x32xf32>
    %85 = vector.shape_cast %84 : vector<1x32x32xf32> to vector<32x32xf32>
    %cst_62 = arith.constant dense<0.000000e+00> : vector<32x32xf32>
    %86 = tpu.matmul %63, %85, %cst_62 {dimension_numbers = #tpu.dot_dimension_numbers<[1], [0], [0], [1], [0, 0, 1, 1], [], []>} : vector<32x32xf32>, vector<32x32xf32>, vector<32x32xf32> -> vector<32x32xf32>
    %87 = arith.addf %83, %86 : vector<32x32xf32>
    %cst_63 = arith.constant 0.000000e+00 : f32
    %88 = vector.broadcast %cst_63 : f32 to vector<32x32xf32>
    %89 = arith.maximumf %87, %88 : vector<32x32xf32>
    %c4_64 = arith.constant 4 : index
    %c0_65 = arith.constant 0 : index
    %90 = vector.load %arg6[%c4_64, %c0_65] : memref<6x32xf32, #tpu.memory_space<vmem>>, vector<1x32xf32>
    %91 = vector.broadcast %90 : vector<1x32xf32> to vector<32x32xf32>
    %92 = arith.addf %89, %91 : vector<32x32xf32>
    %93 = arith.negf %92 : vector<32x32xf32>
    %94 = math.exp %93 : vector<32x32xf32>
    %cst_66 = arith.constant 1.000000e+00 : f32
    %95 = vector.broadcast %cst_66 : f32 to vector<32x32xf32>
    %96 = arith.addf %95, %94 : vector<32x32xf32>
    %97 = arith.divf %95, %96 : vector<32x32xf32>
    %98 = arith.mulf %80, %5 : vector<32x32xf32>
    %cst_67 = arith.constant dense<0.000000e+00> : vector<32x32xf32>
    %99 = tpu.matmul %0, %98, %cst_67 {dimension_numbers = #tpu.dot_dimension_numbers<[1], [0], [0], [1], [0, 0, 1, 1], [], []>} : vector<32x32xf32>, vector<32x32xf32>, vector<32x32xf32> -> vector<32x32xf32>
    %c5 = arith.constant 5 : index
    %c0_68 = arith.constant 0 : index
    %c0_69 = arith.constant 0 : index
    %100 = vector.load %arg5[%c5, %c0_68, %c0_69] : memref<9x32x32xf32, #tpu.memory_space<vmem>>, vector<1x32x32xf32>
    %101 = vector.shape_cast %100 : vector<1x32x32xf32> to vector<32x32xf32>
    %cst_70 = arith.constant dense<0.000000e+00> : vector<32x32xf32>
    %102 = tpu.matmul %62, %101, %cst_70 {dimension_numbers = #tpu.dot_dimension_numbers<[1], [0], [0], [1], [0, 0, 1, 1], [], []>} : vector<32x32xf32>, vector<32x32xf32>, vector<32x32xf32> -> vector<32x32xf32>
    %c8 = arith.constant 8 : index
    %c0_71 = arith.constant 0 : index
    %c0_72 = arith.constant 0 : index
    %103 = vector.load %arg5[%c8, %c0_71, %c0_72] : memref<9x32x32xf32, #tpu.memory_space<vmem>>, vector<1x32x32xf32>
    %104 = vector.shape_cast %103 : vector<1x32x32xf32> to vector<32x32xf32>
    %cst_73 = arith.constant dense<0.000000e+00> : vector<32x32xf32>
    %105 = tpu.matmul %99, %104, %cst_73 {dimension_numbers = #tpu.dot_dimension_numbers<[1], [0], [0], [1], [0, 0, 1, 1], [], []>} : vector<32x32xf32>, vector<32x32xf32>, vector<32x32xf32> -> vector<32x32xf32>
    %106 = arith.addf %102, %105 : vector<32x32xf32>
    %cst_74 = arith.constant 0.000000e+00 : f32
    %107 = vector.broadcast %cst_74 : f32 to vector<32x32xf32>
    %108 = arith.maximumf %106, %107 : vector<32x32xf32>
    %c5_75 = arith.constant 5 : index
    %c0_76 = arith.constant 0 : index
    %109 = vector.load %arg6[%c5_75, %c0_76] : memref<6x32xf32, #tpu.memory_space<vmem>>, vector<1x32xf32>
    %110 = vector.broadcast %109 : vector<1x32xf32> to vector<32x32xf32>
    %111 = arith.addf %108, %110 : vector<32x32xf32>
    %112 = math.tanh %111 : vector<32x32xf32>
    %113 = arith.mulf %97, %5 : vector<32x32xf32>
    %cst_77 = arith.constant 1.000000e+00 : f32
    %114 = vector.broadcast %cst_77 : f32 to vector<32x32xf32>
    %115 = arith.subf %114, %97 : vector<32x32xf32>
    %116 = arith.mulf %115, %112 : vector<32x32xf32>
    %117 = arith.addf %113, %116 : vector<32x32xf32>
    %c0_78 = arith.constant 0 : index
    %c0_79 = arith.constant 0 : index
    %118 = vector.load %arg7[%c0_78, %c0_79] : memref<32x4xf32, #tpu.memory_space<vmem>>, vector<32x4xf32>
    %cst_80 = arith.constant dense<0.000000e+00> : vector<32x4xf32>
    %119 = tpu.matmul %117, %118, %cst_80 {dimension_numbers = #tpu.dot_dimension_numbers<[1], [0], [0], [1], [0, 0, 1, 1], [], []>} : vector<32x32xf32>, vector<32x4xf32>, vector<32x4xf32> -> vector<32x4xf32>
    %c0_81 = arith.constant 0 : index
    %c0_82 = arith.constant 0 : index
    %120 = vector.load %arg8[%c0_81, %c0_82] : memref<1x4xf32, #tpu.memory_space<vmem>>, vector<1x4xf32>
    %121 = vector.broadcast %120 : vector<1x4xf32> to vector<32x4xf32>
    %122 = arith.addf %119, %121 : vector<32x4xf32>
    %c0_83 = arith.constant 0 : index
    %c0_84 = arith.constant 0 : index
    %123 = vector.load %arg9[%c0_83, %c0_84] : memref<32x4xf32, #tpu.memory_space<vmem>>, vector<32x4xf32>
    tpu.vector_store %arg9[%c0_83, %c0_84], %122 {strides = array<i32>} : memref<32x4xf32, #tpu.memory_space<vmem>>, vector<32x4xf32>,
    %c0_85 = arith.constant 0 : index
    %c0_86 = arith.constant 0 : index
    %c0_87 = arith.constant 0 : index
    %124 = vector.load %arg10[%c0_85, %c0_86, %c0_87] : memref<2x32x32xf32, #tpu.memory_space<vmem>>, vector<1x32x32xf32>
    %125 = vector.shape_cast %124 : vector<1x32x32xf32> to vector<32x32xf32>
    %126 = vector.shape_cast %61 : vector<32x32xf32> to vector<1x32x32xf32>
    tpu.vector_store %arg10[%c0_85, %c0_86, %c0_87], %126 {strides = array<i32>} : memref<2x32x32xf32, #tpu.memory_space<vmem>>, vector<1x32x32xf32>,
    %c1_88 = arith.constant 1 : index
    %c0_89 = arith.constant 0 : index
    %c0_90 = arith.constant 0 : index
    %127 = vector.load %arg10[%c1_88, %c0_89, %c0_90] : memref<2x32x32xf32, #tpu.memory_space<vmem>>, vector<1x32x32xf32>
    %128 = vector.shape_cast %127 : vector<1x32x32xf32> to vector<32x32xf32>
    %129 = vector.shape_cast %117 : vector<32x32xf32> to vector<1x32x32xf32>
    tpu.vector_store %arg10[%c1_88, %c0_89, %c0_90], %129 {strides = array<i32>} : memref<2x32x32xf32, #tpu.memory_space<vmem>>, vector<1x32x32xf32>,
    return
  }
  func.func @transform_0(%arg0: i32) -> (i32, i32) {
    %c0_i32 = arith.constant 0 : i32
    %c0_i32_0 = arith.constant 0 : i32
    return %arg0, %c0_i32 : i32, i32
  }
  func.func @transform_1(%arg0: i32) -> (i32, i32, i32) {
    %c0_i32 = arith.constant 0 : i32
    %c0_i32_0 = arith.constant 0 : i32
    %c0_i32_1 = arith.constant 0 : i32
    return %c0_i32, %arg0, %c0_i32_0 : i32, i32, i32
  }
  func.func @transform_2(%arg0: i32) -> (i32, i32) {
    %c0_i32 = arith.constant 0 : i32
    %c0_i32_0 = arith.constant 0 : i32
    %c0_i32_1 = arith.constant 0 : i32
    return %c0_i32, %c0_i32_0 : i32, i32
  }
  func.func @transform_3(%arg0: i32) -> (i32, i32, i32) {
    %c0_i32 = arith.constant 0 : i32
    %c0_i32_0 = arith.constant 0 : i32
    %c0_i32_1 = arith.constant 0 : i32
    %c0_i32_2 = arith.constant 0 : i32
    return %c0_i32, %c0_i32_0, %c0_i32_1 : i32, i32, i32
  }
  func.func @transform_4(%arg0: i32) -> (i32, i32, i32) {
    %c0_i32 = arith.constant 0 : i32
    %c0_i32_0 = arith.constant 0 : i32
    %c0_i32_1 = arith.constant 0 : i32
    %c0_i32_2 = arith.constant 0 : i32
    return %c0_i32, %c0_i32_0, %c0_i32_1 : i32, i32, i32
  }
  func.func @transform_5(%arg0: i32) -> (i32, i32) {
    %c0_i32 = arith.constant 0 : i32
    %c0_i32_0 = arith.constant 0 : i32
    %c0_i32_1 = arith.constant 0 : i32
    return %c0_i32, %c0_i32_0 : i32, i32
  }
  func.func @transform_6(%arg0: i32) -> (i32, i32) {
    %c0_i32 = arith.constant 0 : i32
    %c0_i32_0 = arith.constant 0 : i32
    %c0_i32_1 = arith.constant 0 : i32
    return %c0_i32, %c0_i32_0 : i32, i32
  }
  func.func @transform_7(%arg0: i32) -> (i32, i32) {
    %c0_i32 = arith.constant 0 : i32
    %c0_i32_0 = arith.constant 0 : i32
    %c0_i32_1 = arith.constant 0 : i32
    return %c0_i32, %c0_i32_0 : i32, i32
  }
  func.func @transform_8(%arg0: i32) -> (i32, i32) {
    %c0_i32 = arith.constant 0 : i32
    %c0_i32_0 = arith.constant 0 : i32
    return %arg0, %c0_i32 : i32, i32
  }
  func.func @transform_9(%arg0: i32) -> (i32, i32, i32) {
    %c0_i32 = arith.constant 0 : i32
    %c0_i32_0 = arith.constant 0 : i32
    %c0_i32_1 = arith.constant 0 : i32
    return %c0_i32, %arg0, %c0_i32_0 : i32, i32, i32
  }
}

</mosaic_0001>

<llo_original>
// kernel: decoder_forward.1
$region0: #{decoder_forward.1}
  #allocation0 [shape = 'u32[]', space=smem, size = 0x4, offset = 0x4, fixed_abs, tag = 'smem constant byte address 0x4 - core index']
  #allocation1 [shape = 'u32[144,128]{1,0:T(1,128)}', space=vmem, size = 0x12000, scoped, tag = 'internal scratch']
  %s0 = inlined_call_operand.vmem [shape: f32[32,4], index: 0, kind: input, shape index: {}]
  %s1 = inlined_call_operand.vmem [shape: f32[2,32,32], index: 1, kind: input, shape index: {}, may-alias: {1,9}]
  %s2 = inlined_call_operand.vmem [shape: f32[32,32], index: 2, kind: input, shape index: {}]
  %s3 = inlined_call_operand.vmem [shape: f32[3,4,32], index: 3, kind: input, shape index: {}]
  %s4 = inlined_call_operand.vmem [shape: f32[9,32,32], index: 4, kind: input, shape index: {}]
  %s5 = inlined_call_operand.vmem [shape: f32[6,32], index: 5, kind: input, shape index: {}]
  %s6 = inlined_call_operand.vmem [shape: f32[32,4], index: 6, kind: input, shape index: {}]
  %s7 = inlined_call_operand.vmem [shape: f32[1,4], index: 7, kind: input, shape index: {}]
  %s8 = inlined_call_operand.vmem [shape: f32[32,4], index: 8, kind: output, shape index: {0}]
  %s9 = inlined_call_operand.vmem [shape: f32[2,32,32], index: 9, kind: output, shape index: {1}, may-alias: {1,9}]
  %10 = xla_tuple %s8, %s9
  %s11 = sld [smem:[#allocation0]]
  $region50: #{decoder_forward.1} parent=0
    _
  %s13 = ssub.s32 1, %s11
  %s14 = scalar_select 0, %s13, %s11
  // Predicated region
  $region2: #{decoder_forward.1} parent=0 // pred_check
    _
  $region3: #{decoder_forward.1} parent=0 // pred_check_branch
    %16 = sbr.rel (0) target = $region5
  $region4: #{decoder_forward.1} parent=0 // pred_region
    _
  $region5: #{decoder_forward.1} parent=0 // pred_fallthru
    _
  // Predicated region
  $region6: #{decoder_forward.1} parent=0 // pred_check
    _
  $region7: #{decoder_forward.1} parent=0 // pred_check_branch
    %18 = sbr.rel (0) target = $region9
  $region8: #{decoder_forward.1} parent=0 // pred_region
    _
  $region9: #{decoder_forward.1} parent=0 // pred_fallthru
    _
  // Predicated region
  $region10: #{decoder_forward.1} parent=0 // pred_check
    _
  $region11: #{decoder_forward.1} parent=0 // pred_check_branch
    %20 = sbr.rel (0) target = $region13
  $region12: #{decoder_forward.1} parent=0 // pred_region
    _
  $region13: #{decoder_forward.1} parent=0 // pred_fallthru
    _
  // Predicated region
  $region14: #{decoder_forward.1} parent=0 // pred_check
    _
  $region15: #{decoder_forward.1} parent=0 // pred_check_branch
    %22 = sbr.rel (0) target = $region17
  $region16: #{decoder_forward.1} parent=0 // pred_region
    _
  $region17: #{decoder_forward.1} parent=0 // pred_fallthru
    _
  // Predicated region
  $region18: #{decoder_forward.1} parent=0 // pred_check
    _
  $region19: #{decoder_forward.1} parent=0 // pred_check_branch
    %24 = sbr.rel (0) target = $region21
  $region20: #{decoder_forward.1} parent=0 // pred_region
    _
  $region21: #{decoder_forward.1} parent=0 // pred_fallthru
    _
  // Predicated region
  $region22: #{decoder_forward.1} parent=0 // pred_check
    _
  $region23: #{decoder_forward.1} parent=0 // pred_check_branch
    %26 = sbr.rel (0) target = $region25
  $region24: #{decoder_forward.1} parent=0 // pred_region
    _
  $region25: #{decoder_forward.1} parent=0 // pred_fallthru
    _
  // Predicated region
  $region26: #{decoder_forward.1} parent=0 // pred_check
    _
  $region27: #{decoder_forward.1} parent=0 // pred_check_branch
    %28 = sbr.rel (0) target = $region29
  $region28: #{decoder_forward.1} parent=0 // pred_region
    _
  $region29: #{decoder_forward.1} parent=0 // pred_fallthru
    _
  // Predicated region
  $region30: #{decoder_forward.1} parent=0 // pred_check
    _
  $region31: #{decoder_forward.1} parent=0 // pred_check_branch
    %30 = sbr.rel (0) target = $region33
  $region32: #{decoder_forward.1} parent=0 // pred_region
    _
  $region33: #{decoder_forward.1} parent=0 // pred_fallthru
    _
  %v31 = vld [vmem:[%s2] sm:$0xff]
  %v32 = vld [vmem:[%s2 + $0x8] sm:$0xff]
  %v33 = vld [vmem:[%s2 + $0x10] sm:$0xff]
  %v34 = vld [vmem:[%s2 + $0x18] sm:$0xff]
  %v35 = vld [vmem:[%s0] sm:$0xff]
  %v36 = vld [vmem:[%s0 + $0x8] sm:$0xff]
  %v37 = vld [vmem:[%s0 + $0x10] sm:$0xff]
  %v38 = vld [vmem:[%s0 + $0x18] sm:$0xff]
  %v39 = vld [vmem:[%s1] sm:$0xff]
  %v40 = vld [vmem:[%s1 + $0x8] sm:$0xff]
  %v41 = vld [vmem:[%s1 + $0x10] sm:$0xff]
  %v42 = vld [vmem:[%s1 + $0x18] sm:$0xff]
  %s43 = scalar_lea.vmem %s1, 32
  %v44 = vld [vmem:[%s43] sm:$0xff]
  %v45 = vld [vmem:[%s43 + $0x8] sm:$0xff]
  %v46 = vld [vmem:[%s43 + $0x10] sm:$0xff]
  %v47 = vld [vmem:[%s43 + $0x18] sm:$0xff]
  %vm48 = vcmask 261120
  %v50 = vsel %vm48, %v31, 0
  %v53 = vsel %vm48, %v32, 0
  %v56 = vsel %vm48, %v33, 0
  %v59 = vsel %vm48, %v34, 0
  %61 = vmatprep.subr.mxu0 0.0
  %62 = vmatpush1.msra.mxu0 %v35
  %63 = vmatprep.subr.mxu0 0.0
  %64 = vmatpush1.msra.mxu0 %v36
  %65 = vmatprep.subr.mxu0 0.0
  %66 = vmatpush1.msra.mxu0 %v37
  %67 = vmatprep.subr.mxu0 0.0
  %68 = vmatpush1.msra.mxu0 %v38
  %69 = vmatprep.subr.mxu0 0.0
  %70 = vmatpush1.msra.mxu0 0.0
  %71 = vmatprep.subr.mxu0 0.0
  %72 = vmatpush1.msra.mxu0 0.0
  %73 = vmatprep.subr.mxu0 0.0
  %74 = vmatpush1.msra.mxu0 0.0
  %75 = vmatprep.subr.mxu0 0.0
  %76 = vmatpush1.msra.mxu0 0.0
  %77 = vmatprep.subr.mxu0 0.0
  %78 = vmatpush1.msra.mxu0 0.0
  %79 = vmatprep.subr.mxu0 0.0
  %80 = vmatpush1.msra.mxu0 0.0
  %81 = vmatprep.subr.mxu0 0.0
  %82 = vmatpush1.msra.mxu0 0.0
  %83 = vmatprep.subr.mxu0 0.0
  %84 = vmatpush1.msra.mxu0 0.0
  %85 = vmatprep.subr.mxu0 0.0
  %86 = vmatpush1.msra.mxu0 0.0
  %87 = vmatprep.subr.mxu0 0.0
  %88 = vmatpush1.msra.mxu0 0.0
  %89 = vmatprep.subr.mxu0 0.0
  %90 = vmatpush1.msra.mxu0 0.0
  %91 = vmatprep.subr.mxu0 0.0
  %92 = vmatpush1.msra.mxu0 0.0
  %93 = vmatprep.subr.mxu0 0.0
  %94 = vmatpush1.msra.mxu0 0.0
  %95 = vmatprep.subr.mxu0 0.0
  %96 = vmatpush1.msra.mxu0 0.0
  %97 = vmatprep.subr.mxu0 0.0
  %98 = vmatpush1.msra.mxu0 0.0
  %99 = vmatprep.subr.mxu0 0.0
  %100 = vmatpush1.msra.mxu0 0.0
  %101 = vmatprep.subr.mxu0 0.0
  %102 = vmatpush1.msra.mxu0 0.0
  %103 = vmatprep.subr.mxu0 0.0
  %104 = vmatpush1.msra.mxu0 0.0
  %105 = vmatprep.subr.mxu0 0.0
  %106 = vmatpush1.msra.mxu0 0.0
  %107 = vmatprep.subr.mxu0 0.0
  %108 = vmatpush1.msra.mxu0 0.0
  %109 = vmatprep.subr.mxu0 0.0
  %110 = vmatpush1.msra.mxu0 0.0
  %111 = vmatprep.subr.mxu0 0.0
  %112 = vmatpush1.msra.mxu0 0.0
  %113 = vmatprep.subr.mxu0 0.0
  %114 = vmatpush1.msra.mxu0 0.0
  %115 = vmatprep.subr.mxu0 0.0
  %116 = vmatpush1.msra.mxu0 0.0
  %117 = vmatprep.subr.mxu0 0.0
  %118 = vmatpush1.msra.mxu0 0.0
  %119 = vmatprep.subr.mxu0 0.0
  %120 = vmatpush1.msra.mxu0 0.0
  %121 = vmatprep.subr.mxu0 0.0
  %122 = vmatpush1.msra.mxu0 0.0
  %123 = vmatprep.subr.mxu0 0.0
  %124 = vmatpush1.msra.mxu0 0.0
  %125 = vmatprep.mubr.f32.mxu0 0.0
  %126 = vmatmul.mubr.f32.gmra.mrb[0].mxu0 %v50
  %v127 = vpop.f32.mrb[0].mxu0
  %v128 = vadd.f32 0.0, %v127
  %v129 = vpop.f32.mrb[0].mxu0
  %130 = vmatprep.mubr.f32.mxu0 0.0
  %131 = vmatmul.mubr.f32.gmra.mrb[0].mxu0 %v53
  %v132 = vpop.f32.mrb[0].mxu0
  %v133 = vadd.f32 0.0, %v132
  %v134 = vpop.f32.mrb[0].mxu0
  %135 = vmatprep.mubr.f32.mxu0 0.0
  %136 = vmatmul.mubr.f32.gmra.mrb[0].mxu0 %v56
  %v137 = vpop.f32.mrb[0].mxu0
  %v138 = vadd.f32 0.0, %v137
  %v139 = vpop.f32.mrb[0].mxu0
  %140 = vmatprep.mubr.f32.mxu0 0.0
  %141 = vmatmul.mubr.f32.gmra.mrb[0].mxu0 %v59
  %v142 = vpop.f32.mrb[0].mxu0
  %v143 = vadd.f32 0.0, %v142
  %v144 = vpop.f32.mrb[0].mxu0
  %145 = vdwg.mxu0
  %146 = vmatprep.subr.mxu0 0.0
  %147 = vmatpush1.msra.mxu0 %v39
  %148 = vmatprep.subr.mxu0 0.0
  %149 = vmatpush1.msra.mxu0 %v40
  %150 = vmatprep.subr.mxu0 0.0
  %151 = vmatpush1.msra.mxu0 %v41
  %152 = vmatprep.subr.mxu0 0.0
  %153 = vmatpush1.msra.mxu0 %v42
  %154 = vmatprep.subr.mxu0 0.0
  %155 = vmatpush1.msra.mxu0 0.0
  %156 = vmatprep.subr.mxu0 0.0
  %157 = vmatpush1.msra.mxu0 0.0
  %158 = vmatprep.subr.mxu0 0.0
  %159 = vmatpush1.msra.mxu0 0.0
  %160 = vmatprep.subr.mxu0 0.0
  %161 = vmatpush1.msra.mxu0 0.0
  %162 = vmatprep.subr.mxu0 0.0
  %163 = vmatpush1.msra.mxu0 0.0
  %164 = vmatprep.subr.mxu0 0.0
  %165 = vmatpush1.msra.mxu0 0.0
  %166 = vmatprep.subr.mxu0 0.0
  %167 = vmatpush1.msra.mxu0 0.0
  %168 = vmatprep.subr.mxu0 0.0
  %169 = vmatpush1.msra.mxu0 0.0
  %170 = vmatprep.subr.mxu0 0.0
  %171 = vmatpush1.msra.mxu0 0.0
  %172 = vmatprep.subr.mxu0 0.0
  %173 = vmatpush1.msra.mxu0 0.0
  %174 = vmatprep.subr.mxu0 0.0
  %175 = vmatpush1.msra.mxu0 0.0
  %176 = vmatprep.subr.mxu0 0.0
  %177 = vmatpush1.msra.mxu0 0.0
  %178 = vmatprep.subr.mxu0 0.0
  %179 = vmatpush1.msra.mxu0 0.0
  %180 = vmatprep.subr.mxu0 0.0
  %181 = vmatpush1.msra.mxu0 0.0
  %182 = vmatprep.subr.mxu0 0.0
  %183 = vmatpush1.msra.mxu0 0.0
  %184 = vmatprep.subr.mxu0 0.0
  %185 = vmatpush1.msra.mxu0 0.0
  %186 = vmatprep.subr.mxu0 0.0
  %187 = vmatpush1.msra.mxu0 0.0
  %188 = vmatprep.subr.mxu0 0.0
  %189 = vmatpush1.msra.mxu0 0.0
  %190 = vmatprep.subr.mxu0 0.0
  %191 = vmatpush1.msra.mxu0 0.0
  %192 = vmatprep.subr.mxu0 0.0
  %193 = vmatpush1.msra.mxu0 0.0
  %194 = vmatprep.subr.mxu0 0.0
  %195 = vmatpush1.msra.mxu0 0.0
  %196 = vmatprep.subr.mxu0 0.0
  %197 = vmatpush1.msra.mxu0 0.0
  %198 = vmatprep.subr.mxu0 0.0
  %199 = vmatpush1.msra.mxu0 0.0
  %200 = vmatprep.subr.mxu0 0.0
  %201 = vmatpush1.msra.mxu0 0.0
  %202 = vmatprep.subr.mxu0 0.0
  %203 = vmatpush1.msra.mxu0 0.0
  %204 = vmatprep.subr.mxu0 0.0
  %205 = vmatpush1.msra.mxu0 0.0
  %206 = vmatprep.subr.mxu0 0.0
  %207 = vmatpush1.msra.mxu0 0.0
  %208 = vmatprep.subr.mxu0 0.0
  %209 = vmatpush1.msra.mxu0 0.0
  %210 = vmatprep.mubr.f32.mxu0 0.0
  %211 = vmatmul.mubr.f32.gmra.mrb[0].mxu0 %v50
  %v212 = vpop.f32.mrb[0].mxu0
  %v213 = vadd.f32 0.0, %v212
  %v214 = vpop.f32.mrb[0].mxu0
  %215 = vmatprep.mubr.f32.mxu0 0.0
  %216 = vmatmul.mubr.f32.gmra.mrb[0].mxu0 %v53
  %v217 = vpop.f32.mrb[0].mxu0
  %v218 = vadd.f32 0.0, %v217
  %v219 = vpop.f32.mrb[0].mxu0
  %220 = vmatprep.mubr.f32.mxu0 0.0
  %221 = vmatmul.mubr.f32.gmra.mrb[0].mxu0 %v56
  %v222 = vpop.f32.mrb[0].mxu0
  %v223 = vadd.f32 0.0, %v222
  %v224 = vpop.f32.mrb[0].mxu0
  %225 = vmatprep.mubr.f32.mxu0 0.0
  %226 = vmatmul.mubr.f32.gmra.mrb[0].mxu0 %v59
  %v227 = vpop.f32.mrb[0].mxu0
  %v228 = vadd.f32 0.0, %v227
  %v229 = vpop.f32.mrb[0].mxu0
  %230 = vdwg.mxu0
  %v231 = vld [vmem:[%s3] sm:$0xf]
  %v232 = vld [vmem:[%s4] sm:$0xff]
  %v233 = vld [vmem:[%s4 + $0x8] sm:$0xff]
  %v234 = vld [vmem:[%s4 + $0x10] sm:$0xff]
  %v235 = vld [vmem:[%s4 + $0x18] sm:$0xff]
  %v237 = vsel %vm48, %v213, 0
  %v240 = vsel %vm48, %v218, 0
  %v243 = vsel %vm48, %v223, 0
  %v246 = vsel %vm48, %v228, 0
  %248 = vmatprep.subr.mxu0 0.0
  %249 = vmatpush1.msra.mxu0 %v232
  %250 = vmatprep.subr.mxu0 0.0
  %251 = vmatpush1.msra.mxu0 %v233
  %252 = vmatprep.subr.mxu0 0.0
  %253 = vmatpush1.msra.mxu0 %v234
  %254 = vmatprep.subr.mxu0 0.0
  %255 = vmatpush1.msra.mxu0 %v235
  %256 = vmatprep.subr.mxu0 0.0
  %257 = vmatpush1.msra.mxu0 0.0
  %258 = vmatprep.subr.mxu0 0.0
  %259 = vmatpush1.msra.mxu0 0.0
  %260 = vmatprep.subr.mxu0 0.0
  %261 = vmatpush1.msra.mxu0 0.0
  %262 = vmatprep.subr.mxu0 0.0
  %263 = vmatpush1.msra.mxu0 0.0
  %264 = vmatprep.subr.mxu0 0.0
  %265 = vmatpush1.msra.mxu0 0.0
  %266 = vmatprep.subr.mxu0 0.0
  %267 = vmatpush1.msra.mxu0 0.0
  %268 = vmatprep.subr.mxu0 0.0
  %269 = vmatpush1.msra.mxu0 0.0
  %270 = vmatprep.subr.mxu0 0.0
  %271 = vmatpush1.msra.mxu0 0.0
  %272 = vmatprep.subr.mxu0 0.0
  %273 = vmatpush1.msra.mxu0 0.0
  %274 = vmatprep.subr.mxu0 0.0
  %275 = vmatpush1.msra.mxu0 0.0
  %276 = vmatprep.subr.mxu0 0.0
  %277 = vmatpush1.msra.mxu0 0.0
  %278 = vmatprep.subr.mxu0 0.0
  %279 = vmatpush1.msra.mxu0 0.0
  %280 = vmatprep.subr.mxu0 0.0
  %281 = vmatpush1.msra.mxu0 0.0
  %282 = vmatprep.subr.mxu0 0.0
  %283 = vmatpush1.msra.mxu0 0.0
  %284 = vmatprep.subr.mxu0 0.0
  %285 = vmatpush1.msra.mxu0 0.0
  %286 = vmatprep.subr.mxu0 0.0
  %287 = vmatpush1.msra.mxu0 0.0
  %288 = vmatprep.subr.mxu0 0.0
  %289 = vmatpush1.msra.mxu0 0.0
  %290 = vmatprep.subr.mxu0 0.0
  %291 = vmatpush1.msra.mxu0 0.0
  %292 = vmatprep.subr.mxu0 0.0
  %293 = vmatpush1.msra.mxu0 0.0
  %294 = vmatprep.subr.mxu0 0.0
  %295 = vmatpush1.msra.mxu0 0.0
  %296 = vmatprep.subr.mxu0 0.0
  %297 = vmatpush1.msra.mxu0 0.0
  %298 = vmatprep.subr.mxu0 0.0
  %299 = vmatpush1.msra.mxu0 0.0
  %300 = vmatprep.subr.mxu0 0.0
  %301 = vmatpush1.msra.mxu0 0.0
  %302 = vmatprep.subr.mxu0 0.0
  %303 = vmatpush1.msra.mxu0 0.0
  %304 = vmatprep.subr.mxu0 0.0
  %305 = vmatpush1.msra.mxu0 0.0
  %306 = vmatprep.subr.mxu0 0.0
  %307 = vmatpush1.msra.mxu0 0.0
  %308 = vmatprep.subr.mxu0 0.0
  %309 = vmatpush1.msra.mxu0 0.0
  %310 = vmatprep.subr.mxu0 0.0
  %311 = vmatpush1.msra.mxu0 0.0
  %312 = vmatprep.mubr.f32.mxu0 0.0
  %313 = vmatmul.mubr.f32.gmra.mrb[0].mxu0 %v237
  %v314 = vpop.f32.mrb[0].mxu0
  %v315 = vadd.f32 0.0, %v314
  %v316 = vpop.f32.mrb[0].mxu0
  %317 = vmatprep.mubr.f32.mxu0 0.0
  %318 = vmatmul.mubr.f32.gmra.mrb[0].mxu0 %v240
  %v319 = vpop.f32.mrb[0].mxu0
  %v320 = vadd.f32 0.0, %v319
  %v321 = vpop.f32.mrb[0].mxu0
  %322 = vmatprep.mubr.f32.mxu0 0.0
  %323 = vmatmul.mubr.f32.gmra.mrb[0].mxu0 %v243
  %v324 = vpop.f32.mrb[0].mxu0
  %v325 = vadd.f32 0.0, %v324
  %v326 = vpop.f32.mrb[0].mxu0
  %327 = vmatprep.mubr.f32.mxu0 0.0
  %328 = vmatmul.mubr.f32.gmra.mrb[0].mxu0 %v246
  %v329 = vpop.f32.mrb[0].mxu0
  %v330 = vadd.f32 0.0, %v329
  %v331 = vpop.f32.mrb[0].mxu0
  %332 = vdwg.mxu0
  %vm333 = vcmask 31744
  %v335 = vsel %vm333, %v128, 0
  %v338 = vsel %vm333, %v133, 0
  %v341 = vsel %vm333, %v138, 0
  %v344 = vsel %vm333, %v143, 0
  %vm346 = vcmask 1043456
  %v348 = vsel %vm346, %v231, 0
  %350 = vmatprep.subr.mxu0 0.0
  %351 = vmatpush1.msra.mxu0 %v348
  %352 = vmatprep.subr.mxu0 0.0
  %353 = vmatpush1.msra.mxu0 0.0
  %354 = vmatprep.subr.mxu0 0.0
  %355 = vmatpush1.msra.mxu0 0.0
  %356 = vmatprep.subr.mxu0 0.0
  %357 = vmatpush1.msra.mxu0 0.0
  %358 = vmatprep.subr.mxu0 0.0
  %359 = vmatpush1.msra.mxu0 0.0
  %360 = vmatprep.subr.mxu0 0.0
  %361 = vmatpush1.msra.mxu0 0.0
  %362 = vmatprep.subr.mxu0 0.0
  %363 = vmatpush1.msra.mxu0 0.0
  %364 = vmatprep.subr.mxu0 0.0
  %365 = vmatpush1.msra.mxu0 0.0
  %366 = vmatprep.subr.mxu0 0.0
  %367 = vmatpush1.msra.mxu0 0.0
  %368 = vmatprep.subr.mxu0 0.0
  %369 = vmatpush1.msra.mxu0 0.0
  %370 = vmatprep.subr.mxu0 0.0
  %371 = vmatpush1.msra.mxu0 0.0
  %372 = vmatprep.subr.mxu0 0.0
  %373 = vmatpush1.msra.mxu0 0.0
  %374 = vmatprep.subr.mxu0 0.0
  %375 = vmatpush1.msra.mxu0 0.0
  %376 = vmatprep.subr.mxu0 0.0
  %377 = vmatpush1.msra.mxu0 0.0
  %378 = vmatprep.subr.mxu0 0.0
  %379 = vmatpush1.msra.mxu0 0.0
  %380 = vmatprep.subr.mxu0 0.0
  %381 = vmatpush1.msra.mxu0 0.0
  %382 = vmatprep.subr.mxu0 0.0
  %383 = vmatpush1.msra.mxu0 0.0
  %384 = vmatprep.subr.mxu0 0.0
  %385 = vmatpush1.msra.mxu0 0.0
  %386 = vmatprep.subr.mxu0 0.0
  %387 = vmatpush1.msra.mxu0 0.0
  %388 = vmatprep.subr.mxu0 0.0
  %389 = vmatpush1.msra.mxu0 0.0
  %390 = vmatprep.subr.mxu0 0.0
  %391 = vmatpush1.msra.mxu0 0.0
  %392 = vmatprep.subr.mxu0 0.0
  %393 = vmatpush1.msra.mxu0 0.0
  %394 = vmatprep.subr.mxu0 0.0
  %395 = vmatpush1.msra.mxu0 0.0
  %396 = vmatprep.subr.mxu0 0.0
  %397 = vmatpush1.msra.mxu0 0.0
  %398 = vmatprep.subr.mxu0 0.0
  %399 = vmatpush1.msra.mxu0 0.0
  %400 = vmatprep.subr.mxu0 0.0
  %401 = vmatpush1.msra.mxu0 0.0
  %402 = vmatprep.subr.mxu0 0.0
  %403 = vmatpush1.msra.mxu0 0.0
  %404 = vmatprep.subr.mxu0 0.0
  %405 = vmatpush1.msra.mxu0 0.0
  %406 = vmatprep.subr.mxu0 0.0
  %407 = vmatpush1.msra.mxu0 0.0
  %408 = vmatprep.subr.mxu0 0.0
  %409 = vmatpush1.msra.mxu0 0.0
  %410 = vmatprep.subr.mxu0 0.0
  %411 = vmatpush1.msra.mxu0 0.0
  %412 = vmatprep.subr.mxu0 0.0
  %413 = vmatpush1.msra.mxu0 0.0
  %414 = vmatprep.mubr.f32.mxu0 0.0
  %415 = vmatmul.mubr.f32.gmra.mrb[0].mxu0 %v335
  %v416 = vpop.f32.mrb[0].mxu0
  %v417 = vadd.f32 %v315, %v416
  %v418 = vpop.f32.mrb[0].mxu0
  %419 = vmatprep.mubr.f32.mxu0 0.0
  %420 = vmatmul.mubr.f32.gmra.mrb[0].mxu0 %v338
  %v421 = vpop.f32.mrb[0].mxu0
  %v422 = vadd.f32 %v320, %v421
  %v423 = vpop.f32.mrb[0].mxu0
  %424 = vmatprep.mubr.f32.mxu0 0.0
  %425 = vmatmul.mubr.f32.gmra.mrb[0].mxu0 %v341
  %v426 = vpop.f32.mrb[0].mxu0
  %v427 = vadd.f32 %v325, %v426
  %v428 = vpop.f32.mrb[0].mxu0
  %429 = vmatprep.mubr.f32.mxu0 0.0
  %430 = vmatmul.mubr.f32.gmra.mrb[0].mxu0 %v344
  %v431 = vpop.f32.mrb[0].mxu0
  %v432 = vadd.f32 %v330, %v431
  %v433 = vpop.f32.mrb[0].mxu0
  %434 = vdwg.mxu0
  %v435 = vmax.f32 %v417, 0.0
  %v436 = vmax.f32 %v422, 0.0
  %v437 = vmax.f32 %v427, 0.0
  %v438 = vmax.f32 %v432, 0.0
  %v439 = vld [vmem:[%s5] sm:$0x1]
  %v440 = vlaneseq
  %v441 = vshrl.u32 %v440, 7
  %v442 = vsub.s32 0, %v441
  %v443 = vrot.slane %v439, %v442
  %v444 = vadd.f32 %v435, %v443
  %v445 = vadd.f32 %v436, %v443
  %v446 = vadd.f32 %v437, %v443
  %v447 = vadd.f32 %v438, %v443
  %v448 = vxor.u32 %v444, 2147483648
  %v449 = vxor.u32 %v445, 2147483648
  %v450 = vxor.u32 %v446, 2147483648
  %v451 = vxor.u32 %v447, 2147483648
  %v452 = vmul.f32 %v448, 1.442695
  %v453 = vpow.pop %v452
  %v454 = vmul.f32 %v449, 1.442695
  %v455 = vpow.pop %v454
  %v456 = vmul.f32 %v450, 1.442695
  %v457 = vpow.pop %v456
  %v458 = vmul.f32 %v451, 1.442695
  %v459 = vpow.pop %v458
  %v460 = vadd.f32 %v453, 1.0
  %v461 = vadd.f32 %v455, 1.0
  %v462 = vadd.f32 %v457, 1.0
  %v463 = vadd.f32 %v459, 1.0
  %v464 = vrcp.pop %v460
  %v465 = vmul.f32 1.0, %v464
  %v466 = vrcp.pop %v461
  %v467 = vmul.f32 1.0, %v466
  %v468 = vrcp.pop %v462
  %v469 = vmul.f32 1.0, %v468
  %v470 = vrcp.pop %v463
  %v471 = vmul.f32 1.0, %v470
  %s472 = scalar_lea.vmem %s3, 4
  %v473 = vld [vmem:[%s472] sm:$0xf]
  %s474 = scalar_lea.vmem %s4, 32
  %v475 = vld [vmem:[%s474] sm:$0xff]
  %v476 = vld [vmem:[%s474 + $0x8] sm:$0xff]
  %v477 = vld [vmem:[%s474 + $0x10] sm:$0xff]
  %v478 = vld [vmem:[%s474 + $0x18] sm:$0xff]
  %479 = vmatprep.subr.mxu0 0.0
  %480 = vmatpush1.msra.mxu0 %v475
  %481 = vmatprep.subr.mxu0 0.0
  %482 = vmatpush1.msra.mxu0 %v476
  %483 = vmatprep.subr.mxu0 0.0
  %484 = vmatpush1.msra.mxu0 %v477
  %485 = vmatprep.subr.mxu0 0.0
  %486 = vmatpush1.msra.mxu0 %v478
  %487 = vmatprep.subr.mxu0 0.0
  %488 = vmatpush1.msra.mxu0 0.0
  %489 = vmatprep.subr.mxu0 0.0
  %490 = vmatpush1.msra.mxu0 0.0
  %491 = vmatprep.subr.mxu0 0.0
  %492 = vmatpush1.msra.mxu0 0.0
  %493 = vmatprep.subr.mxu0 0.0
  %494 = vmatpush1.msra.mxu0 0.0
  %495 = vmatprep.subr.mxu0 0.0
  %496 = vmatpush1.msra.mxu0 0.0
  %497 = vmatprep.subr.mxu0 0.0
  %498 = vmatpush1.msra.mxu0 0.0
  %499 = vmatprep.subr.mxu0 0.0
  %500 = vmatpush1.msra.mxu0 0.0
  %501 = vmatprep.subr.mxu0 0.0
  %502 = vmatpush1.msra.mxu0 0.0
  %503 = vmatprep.subr.mxu0 0.0
  %504 = vmatpush1.msra.mxu0 0.0
  %505 = vmatprep.subr.mxu0 0.0
  %506 = vmatpush1.msra.mxu0 0.0
  %507 = vmatprep.subr.mxu0 0.0
  %508 = vmatpush1.msra.mxu0 0.0
  %509 = vmatprep.subr.mxu0 0.0
  %510 = vmatpush1.msra.mxu0 0.0
  %511 = vmatprep.subr.mxu0 0.0
  %512 = vmatpush1.msra.mxu0 0.0
  %513 = vmatprep.subr.mxu0 0.0
  %514 = vmatpush1.msra.mxu0 0.0
  %515 = vmatprep.subr.mxu0 0.0
  %516 = vmatpush1.msra.mxu0 0.0
  %517 = vmatprep.subr.mxu0 0.0
  %518 = vmatpush1.msra.mxu0 0.0
  %519 = vmatprep.subr.mxu0 0.0
  %520 = vmatpush1.msra.mxu0 0.0
  %521 = vmatprep.subr.mxu0 0.0
  %522 = vmatpush1.msra.mxu0 0.0
  %523 = vmatprep.subr.mxu0 0.0
  %524 = vmatpush1.msra.mxu0 0.0
  %525 = vmatprep.subr.mxu0 0.0
  %526 = vmatpush1.msra.mxu0 0.0
  %527 = vmatprep.subr.mxu0 0.0
  %528 = vmatpush1.msra.mxu0 0.0
  %529 = vmatprep.subr.mxu0 0.0
  %530 = vmatpush1.msra.mxu0 0.0
  %531 = vmatprep.subr.mxu0 0.0
  %532 = vmatpush1.msra.mxu0 0.0
  %533 = vmatprep.subr.mxu0 0.0
  %534 = vmatpush1.msra.mxu0 0.0
  %535 = vmatprep.subr.mxu0 0.0
  %536 = vmatpush1.msra.mxu0 0.0
  %537 = vmatprep.subr.mxu0 0.0
  %538 = vmatpush1.msra.mxu0 0.0
  %539 = vmatprep.subr.mxu0 0.0
  %540 = vmatpush1.msra.mxu0 0.0
  %541 = vmatprep.subr.mxu0 0.0
  %542 = vmatpush1.msra.mxu0 0.0
  %543 = vmatprep.mubr.f32.mxu0 0.0
  %544 = vmatmul.mubr.f32.gmra.mrb[0].mxu0 %v237
  %v545 = vpop.f32.mrb[0].mxu0
  %v546 = vadd.f32 0.0, %v545
  %v547 = vpop.f32.mrb[0].mxu0
  %548 = vmatprep.mubr.f32.mxu0 0.0
  %549 = vmatmul.mubr.f32.gmra.mrb[0].mxu0 %v240
  %v550 = vpop.f32.mrb[0].mxu0
  %v551 = vadd.f32 0.0, %v550
  %v552 = vpop.f32.mrb[0].mxu0
  %553 = vmatprep.mubr.f32.mxu0 0.0
  %554 = vmatmul.mubr.f32.gmra.mrb[0].mxu0 %v243
  %v555 = vpop.f32.mrb[0].mxu0
  %v556 = vadd.f32 0.0, %v555
  %v557 = vpop.f32.mrb[0].mxu0
  %558 = vmatprep.mubr.f32.mxu0 0.0
  %559 = vmatmul.mubr.f32.gmra.mrb[0].mxu0 %v246
  %v560 = vpop.f32.mrb[0].mxu0
  %v561 = vadd.f32 0.0, %v560
  %v562 = vpop.f32.mrb[0].mxu0
  %563 = vdwg.mxu0
  %v565 = vsel %vm346, %v473, 0
  %567 = vmatprep.subr.mxu0 0.0
  %568 = vmatpush1.msra.mxu0 %v565
  %569 = vmatprep.subr.mxu0 0.0
  %570 = vmatpush1.msra.mxu0 0.0
  %571 = vmatprep.subr.mxu0 0.0
  %572 = vmatpush1.msra.mxu0 0.0
  %573 = vmatprep.subr.mxu0 0.0
  %574 = vmatpush1.msra.mxu0 0.0
  %575 = vmatprep.subr.mxu0 0.0
  %576 = vmatpush1.msra.mxu0 0.0
  %577 = vmatprep.subr.mxu0 0.0
  %578 = vmatpush1.msra.mxu0 0.0
  %579 = vmatprep.subr.mxu0 0.0
  %580 = vmatpush1.msra.mxu0 0.0
  %581 = vmatprep.subr.mxu0 0.0
  %582 = vmatpush1.msra.mxu0 0.0
  %583 = vmatprep.subr.mxu0 0.0
  %584 = vmatpush1.msra.mxu0 0.0
  %585 = vmatprep.subr.mxu0 0.0
  %586 = vmatpush1.msra.mxu0 0.0
  %587 = vmatprep.subr.mxu0 0.0
  %588 = vmatpush1.msra.mxu0 0.0
  %589 = vmatprep.subr.mxu0 0.0
  %590 = vmatpush1.msra.mxu0 0.0
  %591 = vmatprep.subr.mxu0 0.0
  %592 = vmatpush1.msra.mxu0 0.0
  %593 = vmatprep.subr.mxu0 0.0
  %594 = vmatpush1.msra.mxu0 0.0
  %595 = vmatprep.subr.mxu0 0.0
  %596 = vmatpush1.msra.mxu0 0.0
  %597 = vmatprep.subr.mxu0 0.0
  %598 = vmatpush1.msra.mxu0 0.0
  %599 = vmatprep.subr.mxu0 0.0
  %600 = vmatpush1.msra.mxu0 0.0
  %601 = vmatprep.subr.mxu0 0.0
  %602 = vmatpush1.msra.mxu0 0.0
  %603 = vmatprep.subr.mxu0 0.0
  %604 = vmatpush1.msra.mxu0 0.0
  %605 = vmatprep.subr.mxu0 0.0
  %606 = vmatpush1.msra.mxu0 0.0
  %607 = vmatprep.subr.mxu0 0.0
  %608 = vmatpush1.msra.mxu0 0.0
  %609 = vmatprep.subr.mxu0 0.0
  %610 = vmatpush1.msra.mxu0 0.0
  %611 = vmatprep.subr.mxu0 0.0
  %612 = vmatpush1.msra.mxu0 0.0
  %613 = vmatprep.subr.mxu0 0.0
  %614 = vmatpush1.msra.mxu0 0.0
  %615 = vmatprep.subr.mxu0 0.0
  %616 = vmatpush1.msra.mxu0 0.0
  %617 = vmatprep.subr.mxu0 0.0
  %618 = vmatpush1.msra.mxu0 0.0
  %619 = vmatprep.subr.mxu0 0.0
  %620 = vmatpush1.msra.mxu0 0.0
  %621 = vmatprep.subr.mxu0 0.0
  %622 = vmatpush1.msra.mxu0 0.0
  %623 = vmatprep.subr.mxu0 0.0
  %624 = vmatpush1.msra.mxu0 0.0
  %625 = vmatprep.subr.mxu0 0.0
  %626 = vmatpush1.msra.mxu0 0.0
  %627 = vmatprep.subr.mxu0 0.0
  %628 = vmatpush1.msra.mxu0 0.0
  %629 = vmatprep.subr.mxu0 0.0
  %630 = vmatpush1.msra.mxu0 0.0
  %631 = vmatprep.mubr.f32.mxu0 0.0
  %632 = vmatmul.mubr.f32.gmra.mrb[0].mxu0 %v335
  %v633 = vpop.f32.mrb[0].mxu0
  %v634 = vadd.f32 %v546, %v633
  %v635 = vpop.f32.mrb[0].mxu0
  %636 = vmatprep.mubr.f32.mxu0 0.0
  %637 = vmatmul.mubr.f32.gmra.mrb[0].mxu0 %v338
  %v638 = vpop.f32.mrb[0].mxu0
  %v639 = vadd.f32 %v551, %v638
  %v640 = vpop.f32.mrb[0].mxu0
  %641 = vmatprep.mubr.f32.mxu0 0.0
  %642 = vmatmul.mubr.f32.gmra.mrb[0].mxu0 %v341
  %v643 = vpop.f32.mrb[0].mxu0
  %v644 = vadd.f32 %v556, %v643
  %v645 = vpop.f32.mrb[0].mxu0
  %646 = vmatprep.mubr.f32.mxu0 0.0
  %647 = vmatmul.mubr.f32.gmra.mrb[0].mxu0 %v344
  %v648 = vpop.f32.mrb[0].mxu0
  %v649 = vadd.f32 %v561, %v648
  %v650 = vpop.f32.mrb[0].mxu0
  %651 = vdwg.mxu0
  %v652 = vmax.f32 %v634, 0.0
  %v653 = vmax.f32 %v639, 0.0
  %v654 = vmax.f32 %v644, 0.0
  %v655 = vmax.f32 %v649, 0.0
  %v656 = vld [vmem:[%s5 + $0x1] sm:$0x1]
  %v657 = vlaneseq
  %v658 = vshrl.u32 %v657, 7
  %v659 = vsub.s32 0, %v658
  %v660 = vrot.slane %v656, %v659
  %v661 = vadd.f32 %v652, %v660
  %v662 = vadd.f32 %v653, %v660
  %v663 = vadd.f32 %v654, %v660
  %v664 = vadd.f32 %v655, %v660
  %v665 = vxor.u32 %v661, 2147483648
  %v666 = vxor.u32 %v662, 2147483648
  %v667 = vxor.u32 %v663, 2147483648
  %v668 = vxor.u32 %v664, 2147483648
  %v669 = vmul.f32 %v665, 1.442695
  %v670 = vpow.pop %v669
  %v671 = vmul.f32 %v666, 1.442695
  %v672 = vpow.pop %v671
  %v673 = vmul.f32 %v667, 1.442695
  %v674 = vpow.pop %v673
  %v675 = vmul.f32 %v668, 1.442695
  %v676 = vpow.pop %v675
  %v677 = vadd.f32 %v670, 1.0
  %v678 = vadd.f32 %v672, 1.0
  %v679 = vadd.f32 %v674, 1.0
  %v680 = vadd.f32 %v676, 1.0
  %v681 = vrcp.pop %v677
  %v682 = vmul.f32 1.0, %v681
  %v683 = vrcp.pop %v678
  %v684 = vmul.f32 1.0, %v683
  %v685 = vrcp.pop %v679
  %v686 = vmul.f32 1.0, %v685
  %v687 = vrcp.pop %v680
  %v688 = vmul.f32 1.0, %v687
  %v689 = vmul.f32 %v465, %v39
  %v690 = vmul.f32 %v467, %v40
  %v691 = vmul.f32 %v469, %v41
  %v692 = vmul.f32 %v471, %v42
  %693 = vmatprep.subr.mxu0 0.0
  %694 = vmatpush1.msra.mxu0 %v689
  %695 = vmatprep.subr.mxu0 0.0
  %696 = vmatpush1.msra.mxu0 %v690
  %697 = vmatprep.subr.mxu0 0.0
  %698 = vmatpush1.msra.mxu0 %v691
  %699 = vmatprep.subr.mxu0 0.0
  %700 = vmatpush1.msra.mxu0 %v692
  %701 = vmatprep.subr.mxu0 0.0
  %702 = vmatpush1.msra.mxu0 0.0
  %703 = vmatprep.subr.mxu0 0.0
  %704 = vmatpush1.msra.mxu0 0.0
  %705 = vmatprep.subr.mxu0 0.0
  %706 = vmatpush1.msra.mxu0 0.0
  %707 = vmatprep.subr.mxu0 0.0
  %708 = vmatpush1.msra.mxu0 0.0
  %709 = vmatprep.subr.mxu0 0.0
  %710 = vmatpush1.msra.mxu0 0.0
  %711 = vmatprep.subr.mxu0 0.0
  %712 = vmatpush1.msra.mxu0 0.0
  %713 = vmatprep.subr.mxu0 0.0
  %714 = vmatpush1.msra.mxu0 0.0
  %715 = vmatprep.subr.mxu0 0.0
  %716 = vmatpush1.msra.mxu0 0.0
  %717 = vmatprep.subr.mxu0 0.0
  %718 = vmatpush1.msra.mxu0 0.0
  %719 = vmatprep.subr.mxu0 0.0
  %720 = vmatpush1.msra.mxu0 0.0
  %721 = vmatprep.subr.mxu0 0.0
  %722 = vmatpush1.msra.mxu0 0.0
  %723 = vmatprep.subr.mxu0 0.0
  %724 = vmatpush1.msra.mxu0 0.0
  %725 = vmatprep.subr.mxu0 0.0
  %726 = vmatpush1.msra.mxu0 0.0
  %727 = vmatprep.subr.mxu0 0.0
  %728 = vmatpush1.msra.mxu0 0.0
  %729 = vmatprep.subr.mxu0 0.0
  %730 = vmatpush1.msra.mxu0 0.0
  %731 = vmatprep.subr.mxu0 0.0
  %732 = vmatpush1.msra.mxu0 0.0
  %733 = vmatprep.subr.mxu0 0.0
  %734 = vmatpush1.msra.mxu0 0.0
  %735 = vmatprep.subr.mxu0 0.0
  %736 = vmatpush1.msra.mxu0 0.0
  %737 = vmatprep.subr.mxu0 0.0
  %738 = vmatpush1.msra.mxu0 0.0
  %739 = vmatprep.subr.mxu0 0.0
  %740 = vmatpush1.msra.mxu0 0.0
  %741 = vmatprep.subr.mxu0 0.0
  %742 = vmatpush1.msra.mxu0 0.0
  %743 = vmatprep.subr.mxu0 0.0
  %744 = vmatpush1.msra.mxu0 0.0
  %745 = vmatprep.subr.mxu0 0.0
  %746 = vmatpush1.msra.mxu0 0.0
  %747 = vmatprep.subr.mxu0 0.0
  %748 = vmatpush1.msra.mxu0 0.0
  %749 = vmatprep.subr.mxu0 0.0
  %750 = vmatpush1.msra.mxu0 0.0
  %751 = vmatprep.subr.mxu0 0.0
  %752 = vmatpush1.msra.mxu0 0.0
  %753 = vmatprep.subr.mxu0 0.0
  %754 = vmatpush1.msra.mxu0 0.0
  %755 = vmatprep.subr.mxu0 0.0
  %756 = vmatpush1.msra.mxu0 0.0
  %757 = vmatprep.mubr.f32.mxu0 0.0
  %758 = vmatmul.mubr.f32.gmra.mrb[0].mxu0 %v50
  %v759 = vpop.f32.mrb[0].mxu0
  %v760 = vadd.f32 0.0, %v759
  %v761 = vpop.f32.mrb[0].mxu0
  %762 = vmatprep.mubr.f32.mxu0 0.0
  %763 = vmatmul.mubr.f32.gmra.mrb[0].mxu0 %v53
  %v764 = vpop.f32.mrb[0].mxu0
  %v765 = vadd.f32 0.0, %v764
  %v766 = vpop.f32.mrb[0].mxu0
  %767 = vmatprep.mubr.f32.mxu0 0.0
  %768 = vmatmul.mubr.f32.gmra.mrb[0].mxu0 %v56
  %v769 = vpop.f32.mrb[0].mxu0
  %v770 = vadd.f32 0.0, %v769
  %v771 = vpop.f32.mrb[0].mxu0
  %772 = vmatprep.mubr.f32.mxu0 0.0
  %773 = vmatmul.mubr.f32.gmra.mrb[0].mxu0 %v59
  %v774 = vpop.f32.mrb[0].mxu0
  %v775 = vadd.f32 0.0, %v774
  %v776 = vpop.f32.mrb[0].mxu0
  %777 = vdwg.mxu0
  %s778 = scalar_lea.vmem %s3, 8
  %v779 = vld [vmem:[%s778] sm:$0xf]
  %s780 = scalar_lea.vmem %s4, 64
  %v781 = vld [vmem:[%s780] sm:$0xff]
  %v782 = vld [vmem:[%s780 + $0x8] sm:$0xff]
  %v783 = vld [vmem:[%s780 + $0x10] sm:$0xff]
  %v784 = vld [vmem:[%s780 + $0x18] sm:$0xff]
  %v786 = vsel %vm48, %v760, 0
  %v789 = vsel %vm48, %v765, 0
  %v792 = vsel %vm48, %v770, 0
  %v795 = vsel %vm48, %v775, 0
  %797 = vmatprep.subr.mxu0 0.0
  %798 = vmatpush1.msra.mxu0 %v781
  %799 = vmatprep.subr.mxu0 0.0
  %800 = vmatpush1.msra.mxu0 %v782
  %801 = vmatprep.subr.mxu0 0.0
  %802 = vmatpush1.msra.mxu0 %v783
  %803 = vmatprep.subr.mxu0 0.0
  %804 = vmatpush1.msra.mxu0 %v784
  %805 = vmatprep.subr.mxu0 0.0
  %806 = vmatpush1.msra.mxu0 0.0
  %807 = vmatprep.subr.mxu0 0.0
  %808 = vmatpush1.msra.mxu0 0.0
  %809 = vmatprep.subr.mxu0 0.0
  %810 = vmatpush1.msra.mxu0 0.0
  %811 = vmatprep.subr.mxu0 0.0
  %812 = vmatpush1.msra.mxu0 0.0
  %813 = vmatprep.subr.mxu0 0.0
  %814 = vmatpush1.msra.mxu0 0.0
  %815 = vmatprep.subr.mxu0 0.0
  %816 = vmatpush1.msra.mxu0 0.0
  %817 = vmatprep.subr.mxu0 0.0
  %818 = vmatpush1.msra.mxu0 0.0
  %819 = vmatprep.subr.mxu0 0.0
  %820 = vmatpush1.msra.mxu0 0.0
  %821 = vmatprep.subr.mxu0 0.0
  %822 = vmatpush1.msra.mxu0 0.0
  %823 = vmatprep.subr.mxu0 0.0
  %824 = vmatpush1.msra.mxu0 0.0
  %825 = vmatprep.subr.mxu0 0.0
  %826 = vmatpush1.msra.mxu0 0.0
  %827 = vmatprep.subr.mxu0 0.0
  %828 = vmatpush1.msra.mxu0 0.0
  %829 = vmatprep.subr.mxu0 0.0
  %830 = vmatpush1.msra.mxu0 0.0
  %831 = vmatprep.subr.mxu0 0.0
  %832 = vmatpush1.msra.mxu0 0.0
  %833 = vmatprep.subr.mxu0 0.0
  %834 = vmatpush1.msra.mxu0 0.0
  %835 = vmatprep.subr.mxu0 0.0
  %836 = vmatpush1.msra.mxu0 0.0
  %837 = vmatprep.subr.mxu0 0.0
  %838 = vmatpush1.msra.mxu0 0.0
  %839 = vmatprep.subr.mxu0 0.0
  %840 = vmatpush1.msra.mxu0 0.0
  %841 = vmatprep.subr.mxu0 0.0
  %842 = vmatpush1.msra.mxu0 0.0
  %843 = vmatprep.subr.mxu0 0.0
  %844 = vmatpush1.msra.mxu0 0.0
  %845 = vmatprep.subr.mxu0 0.0
  %846 = vmatpush1.msra.mxu0 0.0
  %847 = vmatprep.subr.mxu0 0.0
  %848 = vmatpush1.msra.mxu0 0.0
  %849 = vmatprep.subr.mxu0 0.0
  %850 = vmatpush1.msra.mxu0 0.0
  %851 = vmatprep.subr.mxu0 0.0
  %852 = vmatpush1.msra.mxu0 0.0
  %853 = vmatprep.subr.mxu0 0.0
  %854 = vmatpush1.msra.mxu0 0.0
  %855 = vmatprep.subr.mxu0 0.0
  %856 = vmatpush1.msra.mxu0 0.0
  %857 = vmatprep.subr.mxu0 0.0
  %858 = vmatpush1.msra.mxu0 0.0
  %859 = vmatprep.subr.mxu0 0.0
  %860 = vmatpush1.msra.mxu0 0.0
  %861 = vmatprep.mubr.f32.mxu0 0.0
  %862 = vmatmul.mubr.f32.gmra.mrb[0].mxu0 %v786
  %v863 = vpop.f32.mrb[0].mxu0
  %v864 = vadd.f32 0.0, %v863
  %v865 = vpop.f32.mrb[0].mxu0
  %866 = vmatprep.mubr.f32.mxu0 0.0
  %867 = vmatmul.mubr.f32.gmra.mrb[0].mxu0 %v789
  %v868 = vpop.f32.mrb[0].mxu0
  %v869 = vadd.f32 0.0, %v868
  %v870 = vpop.f32.mrb[0].mxu0
  %871 = vmatprep.mubr.f32.mxu0 0.0
  %872 = vmatmul.mubr.f32.gmra.mrb[0].mxu0 %v792
  %v873 = vpop.f32.mrb[0].mxu0
  %v874 = vadd.f32 0.0, %v873
  %v875 = vpop.f32.mrb[0].mxu0
  %876 = vmatprep.mubr.f32.mxu0 0.0
  %877 = vmatmul.mubr.f32.gmra.mrb[0].mxu0 %v795
  %v878 = vpop.f32.mrb[0].mxu0
  %v879 = vadd.f32 0.0, %v878
  %v880 = vpop.f32.mrb[0].mxu0
  %881 = vdwg.mxu0
  %v883 = vsel %vm346, %v779, 0
  %885 = vmatprep.subr.mxu0 0.0
  %886 = vmatpush1.msra.mxu0 %v883
  %887 = vmatprep.subr.mxu0 0.0
  %888 = vmatpush1.msra.mxu0 0.0
  %889 = vmatprep.subr.mxu0 0.0
  %890 = vmatpush1.msra.mxu0 0.0
  %891 = vmatprep.subr.mxu0 0.0
  %892 = vmatpush1.msra.mxu0 0.0
  %893 = vmatprep.subr.mxu0 0.0
  %894 = vmatpush1.msra.mxu0 0.0
  %895 = vmatprep.subr.mxu0 0.0
  %896 = vmatpush1.msra.mxu0 0.0
  %897 = vmatprep.subr.mxu0 0.0
  %898 = vmatpush1.msra.mxu0 0.0
  %899 = vmatprep.subr.mxu0 0.0
  %900 = vmatpush1.msra.mxu0 0.0
  %901 = vmatprep.subr.mxu0 0.0
  %902 = vmatpush1.msra.mxu0 0.0
  %903 = vmatprep.subr.mxu0 0.0
  %904 = vmatpush1.msra.mxu0 0.0
  %905 = vmatprep.subr.mxu0 0.0
  %906 = vmatpush1.msra.mxu0 0.0
  %907 = vmatprep.subr.mxu0 0.0
  %908 = vmatpush1.msra.mxu0 0.0
  %909 = vmatprep.subr.mxu0 0.0
  %910 = vmatpush1.msra.mxu0 0.0
  %911 = vmatprep.subr.mxu0 0.0
  %912 = vmatpush1.msra.mxu0 0.0
  %913 = vmatprep.subr.mxu0 0.0
  %914 = vmatpush1.msra.mxu0 0.0
  %915 = vmatprep.subr.mxu0 0.0
  %916 = vmatpush1.msra.mxu0 0.0
  %917 = vmatprep.subr.mxu0 0.0
  %918 = vmatpush1.msra.mxu0 0.0
  %919 = vmatprep.subr.mxu0 0.0
  %920 = vmatpush1.msra.mxu0 0.0
  %921 = vmatprep.subr.mxu0 0.0
  %922 = vmatpush1.msra.mxu0 0.0
  %923 = vmatprep.subr.mxu0 0.0
  %924 = vmatpush1.msra.mxu0 0.0
  %925 = vmatprep.subr.mxu0 0.0
  %926 = vmatpush1.msra.mxu0 0.0
  %927 = vmatprep.subr.mxu0 0.0
  %928 = vmatpush1.msra.mxu0 0.0
  %929 = vmatprep.subr.mxu0 0.0
  %930 = vmatpush1.msra.mxu0 0.0
  %931 = vmatprep.subr.mxu0 0.0
  %932 = vmatpush1.msra.mxu0 0.0
  %933 = vmatprep.subr.mxu0 0.0
  %934 = vmatpush1.msra.mxu0 0.0
  %935 = vmatprep.subr.mxu0 0.0
  %936 = vmatpush1.msra.mxu0 0.0
  %937 = vmatprep.subr.mxu0 0.0
  %938 = vmatpush1.msra.mxu0 0.0
  %939 = vmatprep.subr.mxu0 0.0
  %940 = vmatpush1.msra.mxu0 0.0
  %941 = vmatprep.subr.mxu0 0.0
  %942 = vmatpush1.msra.mxu0 0.0
  %943 = vmatprep.subr.mxu0 0.0
  %944 = vmatpush1.msra.mxu0 0.0
  %945 = vmatprep.subr.mxu0 0.0
  %946 = vmatpush1.msra.mxu0 0.0
  %947 = vmatprep.subr.mxu0 0.0
  %948 = vmatpush1.msra.mxu0 0.0
  %949 = vmatprep.mubr.f32.mxu0 0.0
  %950 = vmatmul.mubr.f32.gmra.mrb[0].mxu0 %v335
  %v951 = vpop.f32.mrb[0].mxu0
  %v952 = vadd.f32 %v864, %v951
  %v953 = vpop.f32.mrb[0].mxu0
  %954 = vmatprep.mubr.f32.mxu0 0.0
  %955 = vmatmul.mubr.f32.gmra.mrb[0].mxu0 %v338
  %v956 = vpop.f32.mrb[0].mxu0
  %v957 = vadd.f32 %v869, %v956
  %v958 = vpop.f32.mrb[0].mxu0
  %959 = vmatprep.mubr.f32.mxu0 0.0
  %960 = vmatmul.mubr.f32.gmra.mrb[0].mxu0 %v341
  %v961 = vpop.f32.mrb[0].mxu0
  %v962 = vadd.f32 %v874, %v961
  %v963 = vpop.f32.mrb[0].mxu0
  %964 = vmatprep.mubr.f32.mxu0 0.0
  %965 = vmatmul.mubr.f32.gmra.mrb[0].mxu0 %v344
  %v966 = vpop.f32.mrb[0].mxu0
  %v967 = vadd.f32 %v879, %v966
  %v968 = vpop.f32.mrb[0].mxu0
  %969 = vdwg.mxu0
  %v970 = vmax.f32 %v952, 0.0
  %v971 = vmax.f32 %v957, 0.0
  %v972 = vmax.f32 %v962, 0.0
  %v973 = vmax.f32 %v967, 0.0
  %v974 = vld [vmem:[%s5 + $0x2] sm:$0x1]
  %v975 = vlaneseq
  %v976 = vshrl.u32 %v975, 7
  %v977 = vsub.s32 0, %v976
  %v978 = vrot.slane %v974, %v977
  %v979 = vadd.f32 %v970, %v978
  %v980 = vadd.f32 %v971, %v978
  %v981 = vadd.f32 %v972, %v978
  %v982 = vadd.f32 %v973, %v978
  %v983 = vtanh.pop %v979
  %v984 = vtanh.pop %v980
  %v985 = vtanh.pop %v981
  %v986 = vtanh.pop %v982
  %v987 = vmul.f32 %v682, %v39
  %v988 = vmul.f32 %v684, %v40
  %v989 = vmul.f32 %v686, %v41
  %v990 = vmul.f32 %v688, %v42
  %v991 = vsub.f32 1.0, %v682
  %v992 = vsub.f32 1.0, %v684
  %v993 = vsub.f32 1.0, %v686
  %v994 = vsub.f32 1.0, %v688
  %v995 = vmul.f32 %v991, %v983
  %v996 = vmul.f32 %v992, %v984
  %v997 = vmul.f32 %v993, %v985
  %v998 = vmul.f32 %v994, %v986
  %v999 = vadd.f32 %v987, %v995
  %v1000 = vadd.f32 %v988, %v996
  %v1001 = vadd.f32 %v989, %v997
  %v1002 = vadd.f32 %v990, %v998
  %1003 = vmatprep.subr.mxu0 0.0
  %1004 = vmatpush1.msra.mxu0 %v999
  %1005 = vmatprep.subr.mxu0 0.0
  %1006 = vmatpush1.msra.mxu0 %v1000
  %1007 = vmatprep.subr.mxu0 0.0
  %1008 = vmatpush1.msra.mxu0 %v1001
  %1009 = vmatprep.subr.mxu0 0.0
  %1010 = vmatpush1.msra.mxu0 %v1002
  %1011 = vmatprep.subr.mxu0 0.0
  %1012 = vmatpush1.msra.mxu0 0.0
  %1013 = vmatprep.subr.mxu0 0.0
  %1014 = vmatpush1.msra.mxu0 0.0
  %1015 = vmatprep.subr.mxu0 0.0
  %1016 = vmatpush1.msra.mxu0 0.0
  %1017 = vmatprep.subr.mxu0 0.0
  %1018 = vmatpush1.msra.mxu0 0.0
  %1019 = vmatprep.subr.mxu0 0.0
  %1020 = vmatpush1.msra.mxu0 0.0
  %1021 = vmatprep.subr.mxu0 0.0
  %1022 = vmatpush1.msra.mxu0 0.0
  %1023 = vmatprep.subr.mxu0 0.0
  %1024 = vmatpush1.msra.mxu0 0.0
  %1025 = vmatprep.subr.mxu0 0.0
  %1026 = vmatpush1.msra.mxu0 0.0
  %1027 = vmatprep.subr.mxu0 0.0
  %1028 = vmatpush1.msra.mxu0 0.0
  %1029 = vmatprep.subr.mxu0 0.0
  %1030 = vmatpush1.msra.mxu0 0.0
  %1031 = vmatprep.subr.mxu0 0.0
  %1032 = vmatpush1.msra.mxu0 0.0
  %1033 = vmatprep.subr.mxu0 0.0
  %1034 = vmatpush1.msra.mxu0 0.0
  %1035 = vmatprep.subr.mxu0 0.0
  %1036 = vmatpush1.msra.mxu0 0.0
  %1037 = vmatprep.subr.mxu0 0.0
  %1038 = vmatpush1.msra.mxu0 0.0
  %1039 = vmatprep.subr.mxu0 0.0
  %1040 = vmatpush1.msra.mxu0 0.0
  %1041 = vmatprep.subr.mxu0 0.0
  %1042 = vmatpush1.msra.mxu0 0.0
  %1043 = vmatprep.subr.mxu0 0.0
  %1044 = vmatpush1.msra.mxu0 0.0
  %1045 = vmatprep.subr.mxu0 0.0
  %1046 = vmatpush1.msra.mxu0 0.0
  %1047 = vmatprep.subr.mxu0 0.0
  %1048 = vmatpush1.msra.mxu0 0.0
  %1049 = vmatprep.subr.mxu0 0.0
  %1050 = vmatpush1.msra.mxu0 0.0
  %1051 = vmatprep.subr.mxu0 0.0
  %1052 = vmatpush1.msra.mxu0 0.0
  %1053 = vmatprep.subr.mxu0 0.0
  %1054 = vmatpush1.msra.mxu0 0.0
  %1055 = vmatprep.subr.mxu0 0.0
  %1056 = vmatpush1.msra.mxu0 0.0
  %1057 = vmatprep.subr.mxu0 0.0
  %1058 = vmatpush1.msra.mxu0 0.0
  %1059 = vmatprep.subr.mxu0 0.0
  %1060 = vmatpush1.msra.mxu0 0.0
  %1061 = vmatprep.subr.mxu0 0.0
  %1062 = vmatpush1.msra.mxu0 0.0
  %1063 = vmatprep.subr.mxu0 0.0
  %1064 = vmatpush1.msra.mxu0 0.0
  %1065 = vmatprep.subr.mxu0 0.0
  %1066 = vmatpush1.msra.mxu0 0.0
  %1067 = vmatprep.mubr.f32.mxu0 0.0
  %1068 = vmatmul.mubr.f32.gmra.mrb[0].mxu0 %v50
  %v1069 = vpop.f32.mrb[0].mxu0
  %v1070 = vadd.f32 0.0, %v1069
  %v1071 = vpop.f32.mrb[0].mxu0
  %1072 = vmatprep.mubr.f32.mxu0 0.0
  %1073 = vmatmul.mubr.f32.gmra.mrb[0].mxu0 %v53
  %v1074 = vpop.f32.mrb[0].mxu0
  %v1075 = vadd.f32 0.0, %v1074
  %v1076 = vpop.f32.mrb[0].mxu0
  %1077 = vmatprep.mubr.f32.mxu0 0.0
  %1078 = vmatmul.mubr.f32.gmra.mrb[0].mxu0 %v56
  %v1079 = vpop.f32.mrb[0].mxu0
  %v1080 = vadd.f32 0.0, %v1079
  %v1081 = vpop.f32.mrb[0].mxu0
  %1082 = vmatprep.mubr.f32.mxu0 0.0
  %1083 = vmatmul.mubr.f32.gmra.mrb[0].mxu0 %v59
  %v1084 = vpop.f32.mrb[0].mxu0
  %v1085 = vadd.f32 0.0, %v1084
  %v1086 = vpop.f32.mrb[0].mxu0
  %1087 = vdwg.mxu0
  %1088 = vmatprep.subr.mxu0 0.0
  %1089 = vmatpush1.msra.mxu0 %v44
  %1090 = vmatprep.subr.mxu0 0.0
  %1091 = vmatpush1.msra.mxu0 %v45
  %1092 = vmatprep.subr.mxu0 0.0
  %1093 = vmatpush1.msra.mxu0 %v46
  %1094 = vmatprep.subr.mxu0 0.0
  %1095 = vmatpush1.msra.mxu0 %v47
  %1096 = vmatprep.subr.mxu0 0.0
  %1097 = vmatpush1.msra.mxu0 0.0
  %1098 = vmatprep.subr.mxu0 0.0
  %1099 = vmatpush1.msra.mxu0 0.0
  %1100 = vmatprep.subr.mxu0 0.0
  %1101 = vmatpush1.msra.mxu0 0.0
  %1102 = vmatprep.subr.mxu0 0.0
  %1103 = vmatpush1.msra.mxu0 0.0
  %1104 = vmatprep.subr.mxu0 0.0
  %1105 = vmatpush1.msra.mxu0 0.0
  %1106 = vmatprep.subr.mxu0 0.0
  %1107 = vmatpush1.msra.mxu0 0.0
  %1108 = vmatprep.subr.mxu0 0.0
  %1109 = vmatpush1.msra.mxu0 0.0
  %1110 = vmatprep.subr.mxu0 0.0
  %1111 = vmatpush1.msra.mxu0 0.0
  %1112 = vmatprep.subr.mxu0 0.0
  %1113 = vmatpush1.msra.mxu0 0.0
  %1114 = vmatprep.subr.mxu0 0.0
  %1115 = vmatpush1.msra.mxu0 0.0
  %1116 = vmatprep.subr.mxu0 0.0
  %1117 = vmatpush1.msra.mxu0 0.0
  %1118 = vmatprep.subr.mxu0 0.0
  %1119 = vmatpush1.msra.mxu0 0.0
  %1120 = vmatprep.subr.mxu0 0.0
  %1121 = vmatpush1.msra.mxu0 0.0
  %1122 = vmatprep.subr.mxu0 0.0
  %1123 = vmatpush1.msra.mxu0 0.0
  %1124 = vmatprep.subr.mxu0 0.0
  %1125 = vmatpush1.msra.mxu0 0.0
  %1126 = vmatprep.subr.mxu0 0.0
  %1127 = vmatpush1.msra.mxu0 0.0
  %1128 = vmatprep.subr.mxu0 0.0
  %1129 = vmatpush1.msra.mxu0 0.0
  %1130 = vmatprep.subr.mxu0 0.0
  %1131 = vmatpush1.msra.mxu0 0.0
  %1132 = vmatprep.subr.mxu0 0.0
  %1133 = vmatpush1.msra.mxu0 0.0
  %1134 = vmatprep.subr.mxu0 0.0
  %1135 = vmatpush1.msra.mxu0 0.0
  %1136 = vmatprep.subr.mxu0 0.0
  %1137 = vmatpush1.msra.mxu0 0.0
  %1138 = vmatprep.subr.mxu0 0.0
  %1139 = vmatpush1.msra.mxu0 0.0
  %1140 = vmatprep.subr.mxu0 0.0
  %1141 = vmatpush1.msra.mxu0 0.0
  %1142 = vmatprep.subr.mxu0 0.0
  %1143 = vmatpush1.msra.mxu0 0.0
  %1144 = vmatprep.subr.mxu0 0.0
  %1145 = vmatpush1.msra.mxu0 0.0
  %1146 = vmatprep.subr.mxu0 0.0
  %1147 = vmatpush1.msra.mxu0 0.0
  %1148 = vmatprep.subr.mxu0 0.0
  %1149 = vmatpush1.msra.mxu0 0.0
  %1150 = vmatprep.subr.mxu0 0.0
  %1151 = vmatpush1.msra.mxu0 0.0
  %1152 = vmatprep.mubr.f32.mxu0 0.0
  %1153 = vmatmul.mubr.f32.gmra.mrb[0].mxu0 %v50
  %v1154 = vpop.f32.mrb[0].mxu0
  %v1155 = vadd.f32 0.0, %v1154
  %v1156 = vpop.f32.mrb[0].mxu0
  %1157 = vmatprep.mubr.f32.mxu0 0.0
  %1158 = vmatmul.mubr.f32.gmra.mrb[0].mxu0 %v53
  %v1159 = vpop.f32.mrb[0].mxu0
  %v1160 = vadd.f32 0.0, %v1159
  %v1161 = vpop.f32.mrb[0].mxu0
  %1162 = vmatprep.mubr.f32.mxu0 0.0
  %1163 = vmatmul.mubr.f32.gmra.mrb[0].mxu0 %v56
  %v1164 = vpop.f32.mrb[0].mxu0
  %v1165 = vadd.f32 0.0, %v1164
  %v1166 = vpop.f32.mrb[0].mxu0
  %1167 = vmatprep.mubr.f32.mxu0 0.0
  %1168 = vmatmul.mubr.f32.gmra.mrb[0].mxu0 %v59
  %v1169 = vpop.f32.mrb[0].mxu0
  %v1170 = vadd.f32 0.0, %v1169
  %v1171 = vpop.f32.mrb[0].mxu0
  %1172 = vdwg.mxu0
  %s1173 = scalar_lea.vmem %s4, 96
  %v1174 = vld [vmem:[%s1173] sm:$0xff]
  %v1175 = vld [vmem:[%s1173 + $0x8] sm:$0xff]
  %v1176 = vld [vmem:[%s1173 + $0x10] sm:$0xff]
  %v1177 = vld [vmem:[%s1173 + $0x18] sm:$0xff]
  %s1178 = scalar_lea.vmem %s4, 192
  %v1179 = vld [vmem:[%s1178] sm:$0xff]
  %v1180 = vld [vmem:[%s1178 + $0x8] sm:$0xff]
  %v1181 = vld [vmem:[%s1178 + $0x10] sm:$0xff]
  %v1182 = vld [vmem:[%s1178 + $0x18] sm:$0xff]
  %v1184 = vsel %vm48, %v1155, 0
  %v1187 = vsel %vm48, %v1160, 0
  %v1190 = vsel %vm48, %v1165, 0
  %v1193 = vsel %vm48, %v1170, 0
  %1195 = vmatprep.subr.mxu0 0.0
  %1196 = vmatpush1.msra.mxu0 %v1179
  %1197 = vmatprep.subr.mxu0 0.0
  %1198 = vmatpush1.msra.mxu0 %v1180
  %1199 = vmatprep.subr.mxu0 0.0
  %1200 = vmatpush1.msra.mxu0 %v1181
  %1201 = vmatprep.subr.mxu0 0.0
  %1202 = vmatpush1.msra.mxu0 %v1182
  %1203 = vmatprep.subr.mxu0 0.0
  %1204 = vmatpush1.msra.mxu0 0.0
  %1205 = vmatprep.subr.mxu0 0.0
  %1206 = vmatpush1.msra.mxu0 0.0
  %1207 = vmatprep.subr.mxu0 0.0
  %1208 = vmatpush1.msra.mxu0 0.0
  %1209 = vmatprep.subr.mxu0 0.0
  %1210 = vmatpush1.msra.mxu0 0.0
  %1211 = vmatprep.subr.mxu0 0.0
  %1212 = vmatpush1.msra.mxu0 0.0
  %1213 = vmatprep.subr.mxu0 0.0
  %1214 = vmatpush1.msra.mxu0 0.0
  %1215 = vmatprep.subr.mxu0 0.0
  %1216 = vmatpush1.msra.mxu0 0.0
  %1217 = vmatprep.subr.mxu0 0.0
  %1218 = vmatpush1.msra.mxu0 0.0
  %1219 = vmatprep.subr.mxu0 0.0
  %1220 = vmatpush1.msra.mxu0 0.0
  %1221 = vmatprep.subr.mxu0 0.0
  %1222 = vmatpush1.msra.mxu0 0.0
  %1223 = vmatprep.subr.mxu0 0.0
  %1224 = vmatpush1.msra.mxu0 0.0
  %1225 = vmatprep.subr.mxu0 0.0
  %1226 = vmatpush1.msra.mxu0 0.0
  %1227 = vmatprep.subr.mxu0 0.0
  %1228 = vmatpush1.msra.mxu0 0.0
  %1229 = vmatprep.subr.mxu0 0.0
  %1230 = vmatpush1.msra.mxu0 0.0
  %1231 = vmatprep.subr.mxu0 0.0
  %1232 = vmatpush1.msra.mxu0 0.0
  %1233 = vmatprep.subr.mxu0 0.0
  %1234 = vmatpush1.msra.mxu0 0.0
  %1235 = vmatprep.subr.mxu0 0.0
  %1236 = vmatpush1.msra.mxu0 0.0
  %1237 = vmatprep.subr.mxu0 0.0
  %1238 = vmatpush1.msra.mxu0 0.0
  %1239 = vmatprep.subr.mxu0 0.0
  %1240 = vmatpush1.msra.mxu0 0.0
  %1241 = vmatprep.subr.mxu0 0.0
  %1242 = vmatpush1.msra.mxu0 0.0
  %1243 = vmatprep.subr.mxu0 0.0
  %1244 = vmatpush1.msra.mxu0 0.0
  %1245 = vmatprep.subr.mxu0 0.0
  %1246 = vmatpush1.msra.mxu0 0.0
  %1247 = vmatprep.subr.mxu0 0.0
  %1248 = vmatpush1.msra.mxu0 0.0
  %1249 = vmatprep.subr.mxu0 0.0
  %1250 = vmatpush1.msra.mxu0 0.0
  %1251 = vmatprep.subr.mxu0 0.0
  %1252 = vmatpush1.msra.mxu0 0.0
  %1253 = vmatprep.subr.mxu0 0.0
  %1254 = vmatpush1.msra.mxu0 0.0
  %1255 = vmatprep.subr.mxu0 0.0
  %1256 = vmatpush1.msra.mxu0 0.0
  %1257 = vmatprep.subr.mxu0 0.0
  %1258 = vmatpush1.msra.mxu0 0.0
  %1259 = vmatprep.mubr.f32.mxu0 0.0
  %1260 = vmatmul.mubr.f32.gmra.mrb[0].mxu0 %v1184
  %v1261 = vpop.f32.mrb[0].mxu0
  %v1262 = vadd.f32 0.0, %v1261
  %v1263 = vpop.f32.mrb[0].mxu0
  %1264 = vmatprep.mubr.f32.mxu0 0.0
  %1265 = vmatmul.mubr.f32.gmra.mrb[0].mxu0 %v1187
  %v1266 = vpop.f32.mrb[0].mxu0
  %v1267 = vadd.f32 0.0, %v1266
  %v1268 = vpop.f32.mrb[0].mxu0
  %1269 = vmatprep.mubr.f32.mxu0 0.0
  %1270 = vmatmul.mubr.f32.gmra.mrb[0].mxu0 %v1190
  %v1271 = vpop.f32.mrb[0].mxu0
  %v1272 = vadd.f32 0.0, %v1271
  %v1273 = vpop.f32.mrb[0].mxu0
  %1274 = vmatprep.mubr.f32.mxu0 0.0
  %1275 = vmatmul.mubr.f32.gmra.mrb[0].mxu0 %v1193
  %v1276 = vpop.f32.mrb[0].mxu0
  %v1277 = vadd.f32 0.0, %v1276
  %v1278 = vpop.f32.mrb[0].mxu0
  %1279 = vdwg.mxu0
  %v1281 = vsel %vm48, %v1070, 0
  %v1284 = vsel %vm48, %v1075, 0
  %v1287 = vsel %vm48, %v1080, 0
  %v1290 = vsel %vm48, %v1085, 0
  %1292 = vmatprep.subr.mxu0 0.0
  %1293 = vmatpush1.msra.mxu0 %v1174
  %1294 = vmatprep.subr.mxu0 0.0
  %1295 = vmatpush1.msra.mxu0 %v1175
  %1296 = vmatprep.subr.mxu0 0.0
  %1297 = vmatpush1.msra.mxu0 %v1176
  %1298 = vmatprep.subr.mxu0 0.0
  %1299 = vmatpush1.msra.mxu0 %v1177
  %1300 = vmatprep.subr.mxu0 0.0
  %1301 = vmatpush1.msra.mxu0 0.0
  %1302 = vmatprep.subr.mxu0 0.0
  %1303 = vmatpush1.msra.mxu0 0.0
  %1304 = vmatprep.subr.mxu0 0.0
  %1305 = vmatpush1.msra.mxu0 0.0
  %1306 = vmatprep.subr.mxu0 0.0
  %1307 = vmatpush1.msra.mxu0 0.0
  %1308 = vmatprep.subr.mxu0 0.0
  %1309 = vmatpush1.msra.mxu0 0.0
  %1310 = vmatprep.subr.mxu0 0.0
  %1311 = vmatpush1.msra.mxu0 0.0
  %1312 = vmatprep.subr.mxu0 0.0
  %1313 = vmatpush1.msra.mxu0 0.0
  %1314 = vmatprep.subr.mxu0 0.0
  %1315 = vmatpush1.msra.mxu0 0.0
  %1316 = vmatprep.subr.mxu0 0.0
  %1317 = vmatpush1.msra.mxu0 0.0
  %1318 = vmatprep.subr.mxu0 0.0
  %1319 = vmatpush1.msra.mxu0 0.0
  %1320 = vmatprep.subr.mxu0 0.0
  %1321 = vmatpush1.msra.mxu0 0.0
  %1322 = vmatprep.subr.mxu0 0.0
  %1323 = vmatpush1.msra.mxu0 0.0
  %1324 = vmatprep.subr.mxu0 0.0
  %1325 = vmatpush1.msra.mxu0 0.0
  %1326 = vmatprep.subr.mxu0 0.0
  %1327 = vmatpush1.msra.mxu0 0.0
  %1328 = vmatprep.subr.mxu0 0.0
  %1329 = vmatpush1.msra.mxu0 0.0
  %1330 = vmatprep.subr.mxu0 0.0
  %1331 = vmatpush1.msra.mxu0 0.0
  %1332 = vmatprep.subr.mxu0 0.0
  %1333 = vmatpush1.msra.mxu0 0.0
  %1334 = vmatprep.subr.mxu0 0.0
  %1335 = vmatpush1.msra.mxu0 0.0
  %1336 = vmatprep.subr.mxu0 0.0
  %1337 = vmatpush1.msra.mxu0 0.0
  %1338 = vmatprep.subr.mxu0 0.0
  %1339 = vmatpush1.msra.mxu0 0.0
  %1340 = vmatprep.subr.mxu0 0.0
  %1341 = vmatpush1.msra.mxu0 0.0
  %1342 = vmatprep.subr.mxu0 0.0
  %1343 = vmatpush1.msra.mxu0 0.0
  %1344 = vmatprep.subr.mxu0 0.0
  %1345 = vmatpush1.msra.mxu0 0.0
  %1346 = vmatprep.subr.mxu0 0.0
  %1347 = vmatpush1.msra.mxu0 0.0
  %1348 = vmatprep.subr.mxu0 0.0
  %1349 = vmatpush1.msra.mxu0 0.0
  %1350 = vmatprep.subr.mxu0 0.0
  %1351 = vmatpush1.msra.mxu0 0.0
  %1352 = vmatprep.subr.mxu0 0.0
  %1353 = vmatpush1.msra.mxu0 0.0
  %1354 = vmatprep.subr.mxu0 0.0
  %1355 = vmatpush1.msra.mxu0 0.0
  %1356 = vmatprep.mubr.f32.mxu0 0.0
  %1357 = vmatmul.mubr.f32.gmra.mrb[0].mxu0 %v1281
  %v1358 = vpop.f32.mrb[0].mxu0
  %v1359 = vadd.f32 %v1262, %v1358
  %v1360 = vpop.f32.mrb[0].mxu0
  %1361 = vmatprep.mubr.f32.mxu0 0.0
  %1362 = vmatmul.mubr.f32.gmra.mrb[0].mxu0 %v1284
  %v1363 = vpop.f32.mrb[0].mxu0
  %v1364 = vadd.f32 %v1267, %v1363
  %v1365 = vpop.f32.mrb[0].mxu0
  %1366 = vmatprep.mubr.f32.mxu0 0.0
  %1367 = vmatmul.mubr.f32.gmra.mrb[0].mxu0 %v1287
  %v1368 = vpop.f32.mrb[0].mxu0
  %v1369 = vadd.f32 %v1272, %v1368
  %v1370 = vpop.f32.mrb[0].mxu0
  %1371 = vmatprep.mubr.f32.mxu0 0.0
  %1372 = vmatmul.mubr.f32.gmra.mrb[0].mxu0 %v1290
  %v1373 = vpop.f32.mrb[0].mxu0
  %v1374 = vadd.f32 %v1277, %v1373
  %v1375 = vpop.f32.mrb[0].mxu0
  %1376 = vdwg.mxu0
  %v1377 = vmax.f32 %v1359, 0.0
  %v1378 = vmax.f32 %v1364, 0.0
  %v1379 = vmax.f32 %v1369, 0.0
  %v1380 = vmax.f32 %v1374, 0.0
  %v1381 = vld [vmem:[%s5 + $0x3] sm:$0x1]
  %v1382 = vlaneseq
  %v1383 = vshrl.u32 %v1382, 7
  %v1384 = vsub.s32 0, %v1383
  %v1385 = vrot.slane %v1381, %v1384
  %v1386 = vadd.f32 %v1377, %v1385
  %v1387 = vadd.f32 %v1378, %v1385
  %v1388 = vadd.f32 %v1379, %v1385
  %v1389 = vadd.f32 %v1380, %v1385
  %v1390 = vxor.u32 %v1386, 2147483648
  %v1391 = vxor.u32 %v1387, 2147483648
  %v1392 = vxor.u32 %v1388, 2147483648
  %v1393 = vxor.u32 %v1389, 2147483648
  %v1394 = vmul.f32 %v1390, 1.442695
  %v1395 = vpow.pop %v1394
  %v1396 = vmul.f32 %v1391, 1.442695
  %v1397 = vpow.pop %v1396
  %v1398 = vmul.f32 %v1392, 1.442695
  %v1399 = vpow.pop %v1398
  %v1400 = vmul.f32 %v1393, 1.442695
  %v1401 = vpow.pop %v1400
  %v1402 = vadd.f32 %v1395, 1.0
  %v1403 = vadd.f32 %v1397, 1.0
  %v1404 = vadd.f32 %v1399, 1.0
  %v1405 = vadd.f32 %v1401, 1.0
  %v1406 = vrcp.pop %v1402
  %v1407 = vmul.f32 1.0, %v1406
  %v1408 = vrcp.pop %v1403
  %v1409 = vmul.f32 1.0, %v1408
  %v1410 = vrcp.pop %v1404
  %v1411 = vmul.f32 1.0, %v1410
  %v1412 = vrcp.pop %v1405
  %v1413 = vmul.f32 1.0, %v1412
  %s1414 = scalar_lea.vmem %s4, 128
  %v1415 = vld [vmem:[%s1414] sm:$0xff]
  %v1416 = vld [vmem:[%s1414 + $0x8] sm:$0xff]
  %v1417 = vld [vmem:[%s1414 + $0x10] sm:$0xff]
  %v1418 = vld [vmem:[%s1414 + $0x18] sm:$0xff]
  %s1419 = scalar_lea.vmem %s4, 224
  %v1420 = vld [vmem:[%s1419] sm:$0xff]
  %v1421 = vld [vmem:[%s1419 + $0x8] sm:$0xff]
  %v1422 = vld [vmem:[%s1419 + $0x10] sm:$0xff]
  %v1423 = vld [vmem:[%s1419 + $0x18] sm:$0xff]
  %1424 = vmatprep.subr.mxu0 0.0
  %1425 = vmatpush1.msra.mxu0 %v1420
  %1426 = vmatprep.subr.mxu0 0.0
  %1427 = vmatpush1.msra.mxu0 %v1421
  %1428 = vmatprep.subr.mxu0 0.0
  %1429 = vmatpush1.msra.mxu0 %v1422
  %1430 = vmatprep.subr.mxu0 0.0
  %1431 = vmatpush1.msra.mxu0 %v1423
  %1432 = vmatprep.subr.mxu0 0.0
  %1433 = vmatpush1.msra.mxu0 0.0
  %1434 = vmatprep.subr.mxu0 0.0
  %1435 = vmatpush1.msra.mxu0 0.0
  %1436 = vmatprep.subr.mxu0 0.0
  %1437 = vmatpush1.msra.mxu0 0.0
  %1438 = vmatprep.subr.mxu0 0.0
  %1439 = vmatpush1.msra.mxu0 0.0
  %1440 = vmatprep.subr.mxu0 0.0
  %1441 = vmatpush1.msra.mxu0 0.0
  %1442 = vmatprep.subr.mxu0 0.0
  %1443 = vmatpush1.msra.mxu0 0.0
  %1444 = vmatprep.subr.mxu0 0.0
  %1445 = vmatpush1.msra.mxu0 0.0
  %1446 = vmatprep.subr.mxu0 0.0
  %1447 = vmatpush1.msra.mxu0 0.0
  %1448 = vmatprep.subr.mxu0 0.0
  %1449 = vmatpush1.msra.mxu0 0.0
  %1450 = vmatprep.subr.mxu0 0.0
  %1451 = vmatpush1.msra.mxu0 0.0
  %1452 = vmatprep.subr.mxu0 0.0
  %1453 = vmatpush1.msra.mxu0 0.0
  %1454 = vmatprep.subr.mxu0 0.0
  %1455 = vmatpush1.msra.mxu0 0.0
  %1456 = vmatprep.subr.mxu0 0.0
  %1457 = vmatpush1.msra.mxu0 0.0
  %1458 = vmatprep.subr.mxu0 0.0
  %1459 = vmatpush1.msra.mxu0 0.0
  %1460 = vmatprep.subr.mxu0 0.0
  %1461 = vmatpush1.msra.mxu0 0.0
  %1462 = vmatprep.subr.mxu0 0.0
  %1463 = vmatpush1.msra.mxu0 0.0
  %1464 = vmatprep.subr.mxu0 0.0
  %1465 = vmatpush1.msra.mxu0 0.0
  %1466 = vmatprep.subr.mxu0 0.0
  %1467 = vmatpush1.msra.mxu0 0.0
  %1468 = vmatprep.subr.mxu0 0.0
  %1469 = vmatpush1.msra.mxu0 0.0
  %1470 = vmatprep.subr.mxu0 0.0
  %1471 = vmatpush1.msra.mxu0 0.0
  %1472 = vmatprep.subr.mxu0 0.0
  %1473 = vmatpush1.msra.mxu0 0.0
  %1474 = vmatprep.subr.mxu0 0.0
  %1475 = vmatpush1.msra.mxu0 0.0
  %1476 = vmatprep.subr.mxu0 0.0
  %1477 = vmatpush1.msra.mxu0 0.0
  %1478 = vmatprep.subr.mxu0 0.0
  %1479 = vmatpush1.msra.mxu0 0.0
  %1480 = vmatprep.subr.mxu0 0.0
  %1481 = vmatpush1.msra.mxu0 0.0
  %1482 = vmatprep.subr.mxu0 0.0
  %1483 = vmatpush1.msra.mxu0 0.0
  %1484 = vmatprep.subr.mxu0 0.0
  %1485 = vmatpush1.msra.mxu0 0.0
  %1486 = vmatprep.subr.mxu0 0.0
  %1487 = vmatpush1.msra.mxu0 0.0
  %1488 = vmatprep.mubr.f32.mxu0 0.0
  %1489 = vmatmul.mubr.f32.gmra.mrb[0].mxu0 %v1184
  %v1490 = vpop.f32.mrb[0].mxu0
  %v1491 = vadd.f32 0.0, %v1490
  %v1492 = vpop.f32.mrb[0].mxu0
  %1493 = vmatprep.mubr.f32.mxu0 0.0
  %1494 = vmatmul.mubr.f32.gmra.mrb[0].mxu0 %v1187
  %v1495 = vpop.f32.mrb[0].mxu0
  %v1496 = vadd.f32 0.0, %v1495
  %v1497 = vpop.f32.mrb[0].mxu0
  %1498 = vmatprep.mubr.f32.mxu0 0.0
  %1499 = vmatmul.mubr.f32.gmra.mrb[0].mxu0 %v1190
  %v1500 = vpop.f32.mrb[0].mxu0
  %v1501 = vadd.f32 0.0, %v1500
  %v1502 = vpop.f32.mrb[0].mxu0
  %1503 = vmatprep.mubr.f32.mxu0 0.0
  %1504 = vmatmul.mubr.f32.gmra.mrb[0].mxu0 %v1193
  %v1505 = vpop.f32.mrb[0].mxu0
  %v1506 = vadd.f32 0.0, %v1505
  %v1507 = vpop.f32.mrb[0].mxu0
  %1508 = vdwg.mxu0
  %1509 = vmatprep.subr.mxu0 0.0
  %1510 = vmatpush1.msra.mxu0 %v1415
  %1511 = vmatprep.subr.mxu0 0.0
  %1512 = vmatpush1.msra.mxu0 %v1416
  %1513 = vmatprep.subr.mxu0 0.0
  %1514 = vmatpush1.msra.mxu0 %v1417
  %1515 = vmatprep.subr.mxu0 0.0
  %1516 = vmatpush1.msra.mxu0 %v1418
  %1517 = vmatprep.subr.mxu0 0.0
  %1518 = vmatpush1.msra.mxu0 0.0
  %1519 = vmatprep.subr.mxu0 0.0
  %1520 = vmatpush1.msra.mxu0 0.0
  %1521 = vmatprep.subr.mxu0 0.0
  %1522 = vmatpush1.msra.mxu0 0.0
  %1523 = vmatprep.subr.mxu0 0.0
  %1524 = vmatpush1.msra.mxu0 0.0
  %1525 = vmatprep.subr.mxu0 0.0
  %1526 = vmatpush1.msra.mxu0 0.0
  %1527 = vmatprep.subr.mxu0 0.0
  %1528 = vmatpush1.msra.mxu0 0.0
  %1529 = vmatprep.subr.mxu0 0.0
  %1530 = vmatpush1.msra.mxu0 0.0
  %1531 = vmatprep.subr.mxu0 0.0
  %1532 = vmatpush1.msra.mxu0 0.0
  %1533 = vmatprep.subr.mxu0 0.0
  %1534 = vmatpush1.msra.mxu0 0.0
  %1535 = vmatprep.subr.mxu0 0.0
  %1536 = vmatpush1.msra.mxu0 0.0
  %1537 = vmatprep.subr.mxu0 0.0
  %1538 = vmatpush1.msra.mxu0 0.0
  %1539 = vmatprep.subr.mxu0 0.0
  %1540 = vmatpush1.msra.mxu0 0.0
  %1541 = vmatprep.subr.mxu0 0.0
  %1542 = vmatpush1.msra.mxu0 0.0
  %1543 = vmatprep.subr.mxu0 0.0
  %1544 = vmatpush1.msra.mxu0 0.0
  %1545 = vmatprep.subr.mxu0 0.0
  %1546 = vmatpush1.msra.mxu0 0.0
  %1547 = vmatprep.subr.mxu0 0.0
  %1548 = vmatpush1.msra.mxu0 0.0
  %1549 = vmatprep.subr.mxu0 0.0
  %1550 = vmatpush1.msra.mxu0 0.0
  %1551 = vmatprep.subr.mxu0 0.0
  %1552 = vmatpush1.msra.mxu0 0.0
  %1553 = vmatprep.subr.mxu0 0.0
  %1554 = vmatpush1.msra.mxu0 0.0
  %1555 = vmatprep.subr.mxu0 0.0
  %1556 = vmatpush1.msra.mxu0 0.0
  %1557 = vmatprep.subr.mxu0 0.0
  %1558 = vmatpush1.msra.mxu0 0.0
  %1559 = vmatprep.subr.mxu0 0.0
  %1560 = vmatpush1.msra.mxu0 0.0
  %1561 = vmatprep.subr.mxu0 0.0
  %1562 = vmatpush1.msra.mxu0 0.0
  %1563 = vmatprep.subr.mxu0 0.0
  %1564 = vmatpush1.msra.mxu0 0.0
  %1565 = vmatprep.subr.mxu0 0.0
  %1566 = vmatpush1.msra.mxu0 0.0
  %1567 = vmatprep.subr.mxu0 0.0
  %1568 = vmatpush1.msra.mxu0 0.0
  %1569 = vmatprep.subr.mxu0 0.0
  %1570 = vmatpush1.msra.mxu0 0.0
  %1571 = vmatprep.subr.mxu0 0.0
  %1572 = vmatpush1.msra.mxu0 0.0
  %1573 = vmatprep.mubr.f32.mxu0 0.0
  %1574 = vmatmul.mubr.f32.gmra.mrb[0].mxu0 %v1281
  %v1575 = vpop.f32.mrb[0].mxu0
  %v1576 = vadd.f32 %v1491, %v1575
  %v1577 = vpop.f32.mrb[0].mxu0
  %1578 = vmatprep.mubr.f32.mxu0 0.0
  %1579 = vmatmul.mubr.f32.gmra.mrb[0].mxu0 %v1284
  %v1580 = vpop.f32.mrb[0].mxu0
  %v1581 = vadd.f32 %v1496, %v1580
  %v1582 = vpop.f32.mrb[0].mxu0
  %1583 = vmatprep.mubr.f32.mxu0 0.0
  %1584 = vmatmul.mubr.f32.gmra.mrb[0].mxu0 %v1287
  %v1585 = vpop.f32.mrb[0].mxu0
  %v1586 = vadd.f32 %v1501, %v1585
  %v1587 = vpop.f32.mrb[0].mxu0
  %1588 = vmatprep.mubr.f32.mxu0 0.0
  %1589 = vmatmul.mubr.f32.gmra.mrb[0].mxu0 %v1290
  %v1590 = vpop.f32.mrb[0].mxu0
  %v1591 = vadd.f32 %v1506, %v1590
  %v1592 = vpop.f32.mrb[0].mxu0
  %1593 = vdwg.mxu0
  %v1594 = vmax.f32 %v1576, 0.0
  %v1595 = vmax.f32 %v1581, 0.0
  %v1596 = vmax.f32 %v1586, 0.0
  %v1597 = vmax.f32 %v1591, 0.0
  %v1598 = vld [vmem:[%s5 + $0x4] sm:$0x1]
  %v1599 = vlaneseq
  %v1600 = vshrl.u32 %v1599, 7
  %v1601 = vsub.s32 0, %v1600
  %v1602 = vrot.slane %v1598, %v1601
  %v1603 = vadd.f32 %v1594, %v1602
  %v1604 = vadd.f32 %v1595, %v1602
  %v1605 = vadd.f32 %v1596, %v1602
  %v1606 = vadd.f32 %v1597, %v1602
  %v1607 = vxor.u32 %v1603, 2147483648
  %v1608 = vxor.u32 %v1604, 2147483648
  %v1609 = vxor.u32 %v1605, 2147483648
  %v1610 = vxor.u32 %v1606, 2147483648
  %v1611 = vmul.f32 %v1607, 1.442695
  %v1612 = vpow.pop %v1611
  %v1613 = vmul.f32 %v1608, 1.442695
  %v1614 = vpow.pop %v1613
  %v1615 = vmul.f32 %v1609, 1.442695
  %v1616 = vpow.pop %v1615
  %v1617 = vmul.f32 %v1610, 1.442695
  %v1618 = vpow.pop %v1617
  %v1619 = vadd.f32 %v1612, 1.0
  %v1620 = vadd.f32 %v1614, 1.0
  %v1621 = vadd.f32 %v1616, 1.0
  %v1622 = vadd.f32 %v1618, 1.0
  %v1623 = vrcp.pop %v1619
  %v1624 = vmul.f32 1.0, %v1623
  %v1625 = vrcp.pop %v1620
  %v1626 = vmul.f32 1.0, %v1625
  %v1627 = vrcp.pop %v1621
  %v1628 = vmul.f32 1.0, %v1627
  %v1629 = vrcp.pop %v1622
  %v1630 = vmul.f32 1.0, %v1629
  %v1631 = vmul.f32 %v1407, %v44
  %v1632 = vmul.f32 %v1409, %v45
  %v1633 = vmul.f32 %v1411, %v46
  %v1634 = vmul.f32 %v1413, %v47
  %1635 = vmatprep.subr.mxu0 0.0
  %1636 = vmatpush1.msra.mxu0 %v1631
  %1637 = vmatprep.subr.mxu0 0.0
  %1638 = vmatpush1.msra.mxu0 %v1632
  %1639 = vmatprep.subr.mxu0 0.0
  %1640 = vmatpush1.msra.mxu0 %v1633
  %1641 = vmatprep.subr.mxu0 0.0
  %1642 = vmatpush1.msra.mxu0 %v1634
  %1643 = vmatprep.subr.mxu0 0.0
  %1644 = vmatpush1.msra.mxu0 0.0
  %1645 = vmatprep.subr.mxu0 0.0
  %1646 = vmatpush1.msra.mxu0 0.0
  %1647 = vmatprep.subr.mxu0 0.0
  %1648 = vmatpush1.msra.mxu0 0.0
  %1649 = vmatprep.subr.mxu0 0.0
  %1650 = vmatpush1.msra.mxu0 0.0
  %1651 = vmatprep.subr.mxu0 0.0
  %1652 = vmatpush1.msra.mxu0 0.0
  %1653 = vmatprep.subr.mxu0 0.0
  %1654 = vmatpush1.msra.mxu0 0.0
  %1655 = vmatprep.subr.mxu0 0.0
  %1656 = vmatpush1.msra.mxu0 0.0
  %1657 = vmatprep.subr.mxu0 0.0
  %1658 = vmatpush1.msra.mxu0 0.0
  %1659 = vmatprep.subr.mxu0 0.0
  %1660 = vmatpush1.msra.mxu0 0.0
  %1661 = vmatprep.subr.mxu0 0.0
  %1662 = vmatpush1.msra.mxu0 0.0
  %1663 = vmatprep.subr.mxu0 0.0
  %1664 = vmatpush1.msra.mxu0 0.0
  %1665 = vmatprep.subr.mxu0 0.0
  %1666 = vmatpush1.msra.mxu0 0.0
  %1667 = vmatprep.subr.mxu0 0.0
  %1668 = vmatpush1.msra.mxu0 0.0
  %1669 = vmatprep.subr.mxu0 0.0
  %1670 = vmatpush1.msra.mxu0 0.0
  %1671 = vmatprep.subr.mxu0 0.0
  %1672 = vmatpush1.msra.mxu0 0.0
  %1673 = vmatprep.subr.mxu0 0.0
  %1674 = vmatpush1.msra.mxu0 0.0
  %1675 = vmatprep.subr.mxu0 0.0
  %1676 = vmatpush1.msra.mxu0 0.0
  %1677 = vmatprep.subr.mxu0 0.0
  %1678 = vmatpush1.msra.mxu0 0.0
  %1679 = vmatprep.subr.mxu0 0.0
  %1680 = vmatpush1.msra.mxu0 0.0
  %1681 = vmatprep.subr.mxu0 0.0
  %1682 = vmatpush1.msra.mxu0 0.0
  %1683 = vmatprep.subr.mxu0 0.0
  %1684 = vmatpush1.msra.mxu0 0.0
  %1685 = vmatprep.subr.mxu0 0.0
  %1686 = vmatpush1.msra.mxu0 0.0
  %1687 = vmatprep.subr.mxu0 0.0
  %1688 = vmatpush1.msra.mxu0 0.0
  %1689 = vmatprep.subr.mxu0 0.0
  %1690 = vmatpush1.msra.mxu0 0.0
  %1691 = vmatprep.subr.mxu0 0.0
  %1692 = vmatpush1.msra.mxu0 0.0
  %1693 = vmatprep.subr.mxu0 0.0
  %1694 = vmatpush1.msra.mxu0 0.0
  %1695 = vmatprep.subr.mxu0 0.0
  %1696 = vmatpush1.msra.mxu0 0.0
  %1697 = vmatprep.subr.mxu0 0.0
  %1698 = vmatpush1.msra.mxu0 0.0
  %1699 = vmatprep.mubr.f32.mxu0 0.0
  %1700 = vmatmul.mubr.f32.gmra.mrb[0].mxu0 %v50
  %v1701 = vpop.f32.mrb[0].mxu0
  %v1702 = vadd.f32 0.0, %v1701
  %v1703 = vpop.f32.mrb[0].mxu0
  %1704 = vmatprep.mubr.f32.mxu0 0.0
  %1705 = vmatmul.mubr.f32.gmra.mrb[0].mxu0 %v53
  %v1706 = vpop.f32.mrb[0].mxu0
  %v1707 = vadd.f32 0.0, %v1706
  %v1708 = vpop.f32.mrb[0].mxu0
  %1709 = vmatprep.mubr.f32.mxu0 0.0
  %1710 = vmatmul.mubr.f32.gmra.mrb[0].mxu0 %v56
  %v1711 = vpop.f32.mrb[0].mxu0
  %v1712 = vadd.f32 0.0, %v1711
  %v1713 = vpop.f32.mrb[0].mxu0
  %1714 = vmatprep.mubr.f32.mxu0 0.0
  %1715 = vmatmul.mubr.f32.gmra.mrb[0].mxu0 %v59
  %v1716 = vpop.f32.mrb[0].mxu0
  %v1717 = vadd.f32 0.0, %v1716
  %v1718 = vpop.f32.mrb[0].mxu0
  %1719 = vdwg.mxu0
  %s1720 = scalar_lea.vmem %s4, 160
  %v1721 = vld [vmem:[%s1720] sm:$0xff]
  %v1722 = vld [vmem:[%s1720 + $0x8] sm:$0xff]
  %v1723 = vld [vmem:[%s1720 + $0x10] sm:$0xff]
  %v1724 = vld [vmem:[%s1720 + $0x18] sm:$0xff]
  %s1725 = scalar_lea.vmem %s4, 256
  %v1726 = vld [vmem:[%s1725] sm:$0xff]
  %v1727 = vld [vmem:[%s1725 + $0x8] sm:$0xff]
  %v1728 = vld [vmem:[%s1725 + $0x10] sm:$0xff]
  %v1729 = vld [vmem:[%s1725 + $0x18] sm:$0xff]
  %v1731 = vsel %vm48, %v1702, 0
  %v1734 = vsel %vm48, %v1707, 0
  %v1737 = vsel %vm48, %v1712, 0
  %v1740 = vsel %vm48, %v1717, 0
  %1742 = vmatprep.subr.mxu0 0.0
  %1743 = vmatpush1.msra.mxu0 %v1726
  %1744 = vmatprep.subr.mxu0 0.0
  %1745 = vmatpush1.msra.mxu0 %v1727
  %1746 = vmatprep.subr.mxu0 0.0
  %1747 = vmatpush1.msra.mxu0 %v1728
  %1748 = vmatprep.subr.mxu0 0.0
  %1749 = vmatpush1.msra.mxu0 %v1729
  %1750 = vmatprep.subr.mxu0 0.0
  %1751 = vmatpush1.msra.mxu0 0.0
  %1752 = vmatprep.subr.mxu0 0.0
  %1753 = vmatpush1.msra.mxu0 0.0
  %1754 = vmatprep.subr.mxu0 0.0
  %1755 = vmatpush1.msra.mxu0 0.0
  %1756 = vmatprep.subr.mxu0 0.0
  %1757 = vmatpush1.msra.mxu0 0.0
  %1758 = vmatprep.subr.mxu0 0.0
  %1759 = vmatpush1.msra.mxu0 0.0
  %1760 = vmatprep.subr.mxu0 0.0
  %1761 = vmatpush1.msra.mxu0 0.0
  %1762 = vmatprep.subr.mxu0 0.0
  %1763 = vmatpush1.msra.mxu0 0.0
  %1764 = vmatprep.subr.mxu0 0.0
  %1765 = vmatpush1.msra.mxu0 0.0
  %1766 = vmatprep.subr.mxu0 0.0
  %1767 = vmatpush1.msra.mxu0 0.0
  %1768 = vmatprep.subr.mxu0 0.0
  %1769 = vmatpush1.msra.mxu0 0.0
  %1770 = vmatprep.subr.mxu0 0.0
  %1771 = vmatpush1.msra.mxu0 0.0
  %1772 = vmatprep.subr.mxu0 0.0
  %1773 = vmatpush1.msra.mxu0 0.0
  %1774 = vmatprep.subr.mxu0 0.0
  %1775 = vmatpush1.msra.mxu0 0.0
  %1776 = vmatprep.subr.mxu0 0.0
  %1777 = vmatpush1.msra.mxu0 0.0
  %1778 = vmatprep.subr.mxu0 0.0
  %1779 = vmatpush1.msra.mxu0 0.0
  %1780 = vmatprep.subr.mxu0 0.0
  %1781 = vmatpush1.msra.mxu0 0.0
  %1782 = vmatprep.subr.mxu0 0.0
  %1783 = vmatpush1.msra.mxu0 0.0
  %1784 = vmatprep.subr.mxu0 0.0
  %1785 = vmatpush1.msra.mxu0 0.0
  %1786 = vmatprep.subr.mxu0 0.0
  %1787 = vmatpush1.msra.mxu0 0.0
  %1788 = vmatprep.subr.mxu0 0.0
  %1789 = vmatpush1.msra.mxu0 0.0
  %1790 = vmatprep.subr.mxu0 0.0
  %1791 = vmatpush1.msra.mxu0 0.0
  %1792 = vmatprep.subr.mxu0 0.0
  %1793 = vmatpush1.msra.mxu0 0.0
  %1794 = vmatprep.subr.mxu0 0.0
  %1795 = vmatpush1.msra.mxu0 0.0
  %1796 = vmatprep.subr.mxu0 0.0
  %1797 = vmatpush1.msra.mxu0 0.0
  %1798 = vmatprep.subr.mxu0 0.0
  %1799 = vmatpush1.msra.mxu0 0.0
  %1800 = vmatprep.subr.mxu0 0.0
  %1801 = vmatpush1.msra.mxu0 0.0
  %1802 = vmatprep.subr.mxu0 0.0
  %1803 = vmatpush1.msra.mxu0 0.0
  %1804 = vmatprep.subr.mxu0 0.0
  %1805 = vmatpush1.msra.mxu0 0.0
  %1806 = vmatprep.mubr.f32.mxu0 0.0
  %1807 = vmatmul.mubr.f32.gmra.mrb[0].mxu0 %v1731
  %v1808 = vpop.f32.mrb[0].mxu0
  %v1809 = vadd.f32 0.0, %v1808
  %v1810 = vpop.f32.mrb[0].mxu0
  %1811 = vmatprep.mubr.f32.mxu0 0.0
  %1812 = vmatmul.mubr.f32.gmra.mrb[0].mxu0 %v1734
  %v1813 = vpop.f32.mrb[0].mxu0
  %v1814 = vadd.f32 0.0, %v1813
  %v1815 = vpop.f32.mrb[0].mxu0
  %1816 = vmatprep.mubr.f32.mxu0 0.0
  %1817 = vmatmul.mubr.f32.gmra.mrb[0].mxu0 %v1737
  %v1818 = vpop.f32.mrb[0].mxu0
  %v1819 = vadd.f32 0.0, %v1818
  %v1820 = vpop.f32.mrb[0].mxu0
  %1821 = vmatprep.mubr.f32.mxu0 0.0
  %1822 = vmatmul.mubr.f32.gmra.mrb[0].mxu0 %v1740
  %v1823 = vpop.f32.mrb[0].mxu0
  %v1824 = vadd.f32 0.0, %v1823
  %v1825 = vpop.f32.mrb[0].mxu0
  %1826 = vdwg.mxu0
  %1827 = vmatprep.subr.mxu0 0.0
  %1828 = vmatpush1.msra.mxu0 %v1721
  %1829 = vmatprep.subr.mxu0 0.0
  %1830 = vmatpush1.msra.mxu0 %v1722
  %1831 = vmatprep.subr.mxu0 0.0
  %1832 = vmatpush1.msra.mxu0 %v1723
  %1833 = vmatprep.subr.mxu0 0.0
  %1834 = vmatpush1.msra.mxu0 %v1724
  %1835 = vmatprep.subr.mxu0 0.0
  %1836 = vmatpush1.msra.mxu0 0.0
  %1837 = vmatprep.subr.mxu0 0.0
  %1838 = vmatpush1.msra.mxu0 0.0
  %1839 = vmatprep.subr.mxu0 0.0
  %1840 = vmatpush1.msra.mxu0 0.0
  %1841 = vmatprep.subr.mxu0 0.0
  %1842 = vmatpush1.msra.mxu0 0.0
  %1843 = vmatprep.subr.mxu0 0.0
  %1844 = vmatpush1.msra.mxu0 0.0
  %1845 = vmatprep.subr.mxu0 0.0
  %1846 = vmatpush1.msra.mxu0 0.0
  %1847 = vmatprep.subr.mxu0 0.0
  %1848 = vmatpush1.msra.mxu0 0.0
  %1849 = vmatprep.subr.mxu0 0.0
  %1850 = vmatpush1.msra.mxu0 0.0
  %1851 = vmatprep.subr.mxu0 0.0
  %1852 = vmatpush1.msra.mxu0 0.0
  %1853 = vmatprep.subr.mxu0 0.0
  %1854 = vmatpush1.msra.mxu0 0.0
  %1855 = vmatprep.subr.mxu0 0.0
  %1856 = vmatpush1.msra.mxu0 0.0
  %1857 = vmatprep.subr.mxu0 0.0
  %1858 = vmatpush1.msra.mxu0 0.0
  %1859 = vmatprep.subr.mxu0 0.0
  %1860 = vmatpush1.msra.mxu0 0.0
  %1861 = vmatprep.subr.mxu0 0.0
  %1862 = vmatpush1.msra.mxu0 0.0
  %1863 = vmatprep.subr.mxu0 0.0
  %1864 = vmatpush1.msra.mxu0 0.0
  %1865 = vmatprep.subr.mxu0 0.0
  %1866 = vmatpush1.msra.mxu0 0.0
  %1867 = vmatprep.subr.mxu0 0.0
  %1868 = vmatpush1.msra.mxu0 0.0
  %1869 = vmatprep.subr.mxu0 0.0
  %1870 = vmatpush1.msra.mxu0 0.0
  %1871 = vmatprep.subr.mxu0 0.0
  %1872 = vmatpush1.msra.mxu0 0.0
  %1873 = vmatprep.subr.mxu0 0.0
  %1874 = vmatpush1.msra.mxu0 0.0
  %1875 = vmatprep.subr.mxu0 0.0
  %1876 = vmatpush1.msra.mxu0 0.0
  %1877 = vmatprep.subr.mxu0 0.0
  %1878 = vmatpush1.msra.mxu0 0.0
  %1879 = vmatprep.subr.mxu0 0.0
  %1880 = vmatpush1.msra.mxu0 0.0
  %1881 = vmatprep.subr.mxu0 0.0
  %1882 = vmatpush1.msra.mxu0 0.0
  %1883 = vmatprep.subr.mxu0 0.0
  %1884 = vmatpush1.msra.mxu0 0.0
  %1885 = vmatprep.subr.mxu0 0.0
  %1886 = vmatpush1.msra.mxu0 0.0
  %1887 = vmatprep.subr.mxu0 0.0
  %1888 = vmatpush1.msra.mxu0 0.0
  %1889 = vmatprep.subr.mxu0 0.0
  %1890 = vmatpush1.msra.mxu0 0.0
  %1891 = vmatprep.mubr.f32.mxu0 0.0
  %1892 = vmatmul.mubr.f32.gmra.mrb[0].mxu0 %v1281
  %v1893 = vpop.f32.mrb[0].mxu0
  %v1894 = vadd.f32 %v1809, %v1893
  %v1895 = vpop.f32.mrb[0].mxu0
  %1896 = vmatprep.mubr.f32.mxu0 0.0
  %1897 = vmatmul.mubr.f32.gmra.mrb[0].mxu0 %v1284
  %v1898 = vpop.f32.mrb[0].mxu0
  %v1899 = vadd.f32 %v1814, %v1898
  %v1900 = vpop.f32.mrb[0].mxu0
  %1901 = vmatprep.mubr.f32.mxu0 0.0
  %1902 = vmatmul.mubr.f32.gmra.mrb[0].mxu0 %v1287
  %v1903 = vpop.f32.mrb[0].mxu0
  %v1904 = vadd.f32 %v1819, %v1903
  %v1905 = vpop.f32.mrb[0].mxu0
  %1906 = vmatprep.mubr.f32.mxu0 0.0
  %1907 = vmatmul.mubr.f32.gmra.mrb[0].mxu0 %v1290
  %v1908 = vpop.f32.mrb[0].mxu0
  %v1909 = vadd.f32 %v1824, %v1908
  %v1910 = vpop.f32.mrb[0].mxu0
  %1911 = vdwg.mxu0
  %v1912 = vmax.f32 %v1894, 0.0
  %v1913 = vmax.f32 %v1899, 0.0
  %v1914 = vmax.f32 %v1904, 0.0
  %v1915 = vmax.f32 %v1909, 0.0
  %v1916 = vld [vmem:[%s5 + $0x5] sm:$0x1]
  %v1917 = vlaneseq
  %v1918 = vshrl.u32 %v1917, 7
  %v1919 = vsub.s32 0, %v1918
  %v1920 = vrot.slane %v1916, %v1919
  %v1921 = vadd.f32 %v1912, %v1920
  %v1922 = vadd.f32 %v1913, %v1920
  %v1923 = vadd.f32 %v1914, %v1920
  %v1924 = vadd.f32 %v1915, %v1920
  %v1925 = vtanh.pop %v1921
  %v1926 = vtanh.pop %v1922
  %v1927 = vtanh.pop %v1923
  %v1928 = vtanh.pop %v1924
  %v1929 = vmul.f32 %v1624, %v44
  %v1930 = vmul.f32 %v1626, %v45
  %v1931 = vmul.f32 %v1628, %v46
  %v1932 = vmul.f32 %v1630, %v47
  %v1933 = vsub.f32 1.0, %v1624
  %v1934 = vsub.f32 1.0, %v1626
  %v1935 = vsub.f32 1.0, %v1628
  %v1936 = vsub.f32 1.0, %v1630
  %v1937 = vmul.f32 %v1933, %v1925
  %v1938 = vmul.f32 %v1934, %v1926
  %v1939 = vmul.f32 %v1935, %v1927
  %v1940 = vmul.f32 %v1936, %v1928
  %v1941 = vadd.f32 %v1929, %v1937
  %v1942 = vadd.f32 %v1930, %v1938
  %v1943 = vadd.f32 %v1931, %v1939
  %v1944 = vadd.f32 %v1932, %v1940
  %v1945 = vld [vmem:[%s6] sm:$0xff]
  %v1946 = vld [vmem:[%s6 + $0x8] sm:$0xff]
  %v1947 = vld [vmem:[%s6 + $0x10] sm:$0xff]
  %v1948 = vld [vmem:[%s6 + $0x18] sm:$0xff]
  %v1949 = vld [vmem:[%s7] sm:$0x1]
  %v1951 = vlaneseq
  %v1952 = vshrl.u32 %v1951, 7
  %v1953 = vsub.s32 0, %v1952
  %v1954 = vrot.slane %v1949, %v1953
  %v1957 = vsel %vm48, %v1941, 0
  %v1960 = vsel %vm48, %v1942, 0
  %v1963 = vsel %vm48, %v1943, 0
  %v1966 = vsel %vm48, %v1944, 0
  %1968 = vmatprep.subr.mxu0 0.0
  %1969 = vmatpush1.msra.mxu0 %v1945
  %1970 = vmatprep.subr.mxu0 0.0
  %1971 = vmatpush1.msra.mxu0 %v1946
  %1972 = vmatprep.subr.mxu0 0.0
  %1973 = vmatpush1.msra.mxu0 %v1947
  %1974 = vmatprep.subr.mxu0 0.0
  %1975 = vmatpush1.msra.mxu0 %v1948
  %1976 = vmatprep.subr.mxu0 0.0
  %1977 = vmatpush1.msra.mxu0 0.0
  %1978 = vmatprep.subr.mxu0 0.0
  %1979 = vmatpush1.msra.mxu0 0.0
  %1980 = vmatprep.subr.mxu0 0.0
  %1981 = vmatpush1.msra.mxu0 0.0
  %1982 = vmatprep.subr.mxu0 0.0
  %1983 = vmatpush1.msra.mxu0 0.0
  %1984 = vmatprep.subr.mxu0 0.0
  %1985 = vmatpush1.msra.mxu0 0.0
  %1986 = vmatprep.subr.mxu0 0.0
  %1987 = vmatpush1.msra.mxu0 0.0
  %1988 = vmatprep.subr.mxu0 0.0
  %1989 = vmatpush1.msra.mxu0 0.0
  %1990 = vmatprep.subr.mxu0 0.0
  %1991 = vmatpush1.msra.mxu0 0.0
  %1992 = vmatprep.subr.mxu0 0.0
  %1993 = vmatpush1.msra.mxu0 0.0
  %1994 = vmatprep.subr.mxu0 0.0
  %1995 = vmatpush1.msra.mxu0 0.0
  %1996 = vmatprep.subr.mxu0 0.0
  %1997 = vmatpush1.msra.mxu0 0.0
  %1998 = vmatprep.subr.mxu0 0.0
  %1999 = vmatpush1.msra.mxu0 0.0
  %2000 = vmatprep.subr.mxu0 0.0
  %2001 = vmatpush1.msra.mxu0 0.0
  %2002 = vmatprep.subr.mxu0 0.0
  %2003 = vmatpush1.msra.mxu0 0.0
  %2004 = vmatprep.subr.mxu0 0.0
  %2005 = vmatpush1.msra.mxu0 0.0
  %2006 = vmatprep.subr.mxu0 0.0
  %2007 = vmatpush1.msra.mxu0 0.0
  %2008 = vmatprep.subr.mxu0 0.0
  %2009 = vmatpush1.msra.mxu0 0.0
  %2010 = vmatprep.subr.mxu0 0.0
  %2011 = vmatpush1.msra.mxu0 0.0
  %2012 = vmatprep.subr.mxu0 0.0
  %2013 = vmatpush1.msra.mxu0 0.0
  %2014 = vmatprep.subr.mxu0 0.0
  %2015 = vmatpush1.msra.mxu0 0.0
  %2016 = vmatprep.subr.mxu0 0.0
  %2017 = vmatpush1.msra.mxu0 0.0
  %2018 = vmatprep.subr.mxu0 0.0
  %2019 = vmatpush1.msra.mxu0 0.0
  %2020 = vmatprep.subr.mxu0 0.0
  %2021 = vmatpush1.msra.mxu0 0.0
  %2022 = vmatprep.subr.mxu0 0.0
  %2023 = vmatpush1.msra.mxu0 0.0
  %2024 = vmatprep.subr.mxu0 0.0
  %2025 = vmatpush1.msra.mxu0 0.0
  %2026 = vmatprep.subr.mxu0 0.0
  %2027 = vmatpush1.msra.mxu0 0.0
  %2028 = vmatprep.subr.mxu0 0.0
  %2029 = vmatpush1.msra.mxu0 0.0
  %2030 = vmatprep.subr.mxu0 0.0
  %2031 = vmatpush1.msra.mxu0 0.0
  %2032 = vmatprep.mubr.f32.mxu0 0.0
  %2033 = vmatmul.mubr.f32.gmra.mrb[0].mxu0 %v1957
  %v2034 = vpop.f32.mrb[0].mxu0
  %v2035 = vadd.f32 %v1954, %v2034
  %v2036 = vpop.f32.mrb[0].mxu0
  %2037 = vmatprep.mubr.f32.mxu0 0.0
  %2038 = vmatmul.mubr.f32.gmra.mrb[0].mxu0 %v1960
  %v2039 = vpop.f32.mrb[0].mxu0
  %v2040 = vadd.f32 %v1954, %v2039
  %v2041 = vpop.f32.mrb[0].mxu0
  %2042 = vmatprep.mubr.f32.mxu0 0.0
  %2043 = vmatmul.mubr.f32.gmra.mrb[0].mxu0 %v1963
  %v2044 = vpop.f32.mrb[0].mxu0
  %v2045 = vadd.f32 %v1954, %v2044
  %v2046 = vpop.f32.mrb[0].mxu0
  %2047 = vmatprep.mubr.f32.mxu0 0.0
  %2048 = vmatmul.mubr.f32.gmra.mrb[0].mxu0 %v1966
  %v2049 = vpop.f32.mrb[0].mxu0
  %v2050 = vadd.f32 %v1954, %v2049
  %v2051 = vpop.f32.mrb[0].mxu0
  %2052 = vdwg.mxu0
  %2053 = vst.msk [vmem:[%s8] sm:$0xff] %vm333, %v2035
  %2054 = vst.msk [vmem:[%s8 + $0x8] sm:$0xff] %vm333, %v2040
  %2055 = vst.msk [vmem:[%s8 + $0x10] sm:$0xff] %vm333, %v2045
  %2056 = vst.msk [vmem:[%s8 + $0x18] sm:$0xff] %vm333, %v2050
  %2057 = vst.msk [vmem:[%s9] sm:$0xff] %vm48, %v999
  %2058 = vst.msk [vmem:[%s9 + $0x8] sm:$0xff] %vm48, %v1000
  %2059 = vst.msk [vmem:[%s9 + $0x10] sm:$0xff] %vm48, %v1001
  %2060 = vst.msk [vmem:[%s9 + $0x18] sm:$0xff] %vm48, %v1002
  %s2061 = scalar_lea.vmem %s9, 32
  %2062 = vst.msk [vmem:[%s2061] sm:$0xff] %vm48, %v1941
  %2063 = vst.msk [vmem:[%s2061 + $0x8] sm:$0xff] %vm48, %v1942
  %2064 = vst.msk [vmem:[%s2061 + $0x10] sm:$0xff] %vm48, %v1943
  %2065 = vst.msk [vmem:[%s2061 + $0x18] sm:$0xff] %vm48, %v1944
  // Predicated region
  $region34: #{decoder_forward.1} parent=0 // pred_check
    _
  $region35: #{decoder_forward.1} parent=0 // pred_check_branch
    %2067 = sbr.rel (0) target = $region37
  $region36: #{decoder_forward.1} parent=0 // pred_region
    _
  $region37: #{decoder_forward.1} parent=0 // pred_fallthru
    _
  // Predicated region
  $region38: #{decoder_forward.1} parent=0 // pred_check
    _
  $region39: #{decoder_forward.1} parent=0 // pred_check_branch
    %2069 = sbr.rel (0) target = $region41
  $region40: #{decoder_forward.1} parent=0 // pred_region
    _
  $region41: #{decoder_forward.1} parent=0 // pred_fallthru
    _
  // Predicated region
  $region42: #{decoder_forward.1} parent=0 // pred_check
    _
  $region43: #{decoder_forward.1} parent=0 // pred_check_branch
    %2071 = sbr.rel (0) target = $region45
  $region44: #{decoder_forward.1} parent=0 // pred_region
    _
  $region45: #{decoder_forward.1} parent=0 // pred_fallthru
    _
  // Predicated region
  $region46: #{decoder_forward.1} parent=0 // pred_check
    _
  $region47: #{decoder_forward.1} parent=0 // pred_check_branch
    %2073 = sbr.rel (0) target = $region49
  $region48: #{decoder_forward.1} parent=0 // pred_region
    _
  $region49: #{decoder_forward.1} parent=0 // pred_fallthru
    _

</llo_original>
